<compile_context>
chip_gen: v7x
topology: tpu7x:2x2x1
jax: 0.10.0
libtpu: 0.0.40
codegen_flags: <defaults>
</compile_context>

<pallas_src>
import functools
import math

import jax
import jax.numpy as jnp
import numpy as np
from jax.experimental import pallas as pl
from jax.experimental.pallas import tpu as pltpu

# ----------------------------- module config --------------------------------
DIM_IN = 51                 # e.g. composite positional-encoding features
DIM_OUT = 13                # e.g. 1 sdf + 12 feature channels
N_NEURONS = 64              # config['n_neurons']
N_HIDDEN_LAYERS = 2         # config['n_hidden_layers']
OUTPUT_ACTIVATION = "none"  # config.get('output_activation', None) -> identity


def _apply_output_activation(x, name):
    """JAX equivalent of get_activation(name) for the output activation."""
    if name is None or name == "none":
        return x
    if name == "sigmoid":
        return jax.nn.sigmoid(x)
    if name == "tanh":
        return jnp.tanh(x)
    if name == "exp":
        return jnp.exp(x)
    if name == "shifted_exp":
        return jnp.exp(x - 1.0)
    if name == "shifted_softplus":
        return jax.nn.softplus(x - 1.0)
    if name == "scale_-11_01":
        return x * 0.5 + 0.5
    # TODO(synk): 'lin2srgb' / arbitrary F.<name> activations not wired up.
    raise ValueError(f"Unknown output activation: {name}")


# ------------------------------- kernel --------------------------------------
def _vanilla_mlp_kernel(*refs, act_name):
    """One grid step: run the full MLP on a (TILE_N, DIM_IN) block of points.

    refs = (x_ref, w0_ref, ..., w_last_ref, o_ref)
    """
    x_ref = refs[0]
    o_ref = refs[-1]
    w_refs = refs[1:-1]

    h = x_ref[...].astype(jnp.float32)                      # (TILE_N, DIM_IN)
    # hidden layers: Linear (no bias) + ReLU, all on the MXU/VPU in VMEM
    for w_ref in w_refs[:-1]:
        h = jnp.dot(h, w_ref[...], preferred_element_type=jnp.float32)
        h = jnp.maximum(h, 0.0)
    # output layer (no activation inside the Sequential)
    out = jnp.dot(h, w_refs[-1][...], preferred_element_type=jnp.float32)
    out = _apply_output_activation(out, act_name)
    o_ref[...] = out.astype(o_ref.dtype)


# ------------------------------ wrapper ---------------------------------------
def vanilla_mlp(x, weights, *, tile_n=1024, output_activation=OUTPUT_ACTIVATION):
    """x: (N, dim_in) float32; weights: list of (d_k, d_{k+1}) float32 matrices
    (already transposed to x @ W layout).  Returns (N, dim_out) float32."""
    n, d_in = x.shape
    assert d_in == weights[0].shape[0], "input dim mismatch with first layer"
    d_out = weights[-1].shape[1]

    # Ragged N: pad to a tile multiple (bias-free MLP maps zero rows to zero).
    n_tiles = pl.cdiv(n, tile_n)
    n_pad = n_tiles * tile_n
    if n_pad != n:
        x = jnp.pad(x, ((0, n_pad - n), (0, 0)))

    in_specs = [pl.BlockSpec((tile_n, d_in), lambda i: (i, 0))]
    for w in weights:
        # Full-array weight blocks with a constant index_map: fetched once,
        # VMEM-resident across all grid steps.
        in_specs.append(pl.BlockSpec(w.shape, lambda i: (0, 0)))

    flops = 2 * n_pad * sum(w.shape[0] * w.shape[1] for w in weights)
    bytes_accessed = 4 * (n_pad * (d_in + d_out) + sum(int(w.size) for w in weights))

    out = pl.pallas_call(
        functools.partial(_vanilla_mlp_kernel, act_name=output_activation),
        out_shape=jax.ShapeDtypeStruct((n_pad, d_out), jnp.float32),
        grid_spec=pltpu.PrefetchScalarGridSpec(
            num_scalar_prefetch=0,
            grid=(n_tiles,),
            in_specs=in_specs,
            out_specs=pl.BlockSpec((tile_n, d_out), lambda i: (i, 0)),
        ),
        compiler_params=pltpu.CompilerParams(
            dimension_semantics=("parallel",),
        ),
        cost_estimate=pl.CostEstimate(
            flops=flops, transcendentals=0, bytes_accessed=bytes_accessed),
    )(x, *weights)

    return out[:n]


# ------------------------------ reference -------------------------------------
def vanilla_mlp_ref(x, weights, output_activation=OUTPUT_ACTIVATION):
    """Pure-JAX reference matching the PyTorch forward semantics."""
    h = x
    for w in weights[:-1]:
        h = jnp.maximum(h @ w, 0.0)
    out = h @ weights[-1]
    return _apply_output_activation(out, output_activation)


# -------------------------------- main ----------------------------------------
if __name__ == "__main__":
    key = jax.random.PRNGKey(0)
    n_weights = N_HIDDEN_LAYERS + 1
    kx, *kws = jax.random.split(key, 1 + n_weights)

    # Small, ragged point count (not a tile multiple) to exercise padding.
    n_points = 1000
    x = jax.random.uniform(kx, (n_points, DIM_IN), dtype=jnp.float32,
                           minval=-1.0, maxval=1.0)

    # Deterministic weights, PyTorch-nn.Linear-style uniform(-1/sqrt(fan_in), ...)
    # stored as (in, out) so the kernel computes x @ W.
    dims = [DIM_IN] + [N_NEURONS] * N_HIDDEN_LAYERS + [DIM_OUT]
    weights = []
    for i, (d0, d1) in enumerate(zip(dims[:-1], dims[1:])):
        bound = 1.0 / math.sqrt(d0)
        weights.append(jax.random.uniform(kws[i], (d0, d1), dtype=jnp.float32,
                                          minval=-bound, maxval=bound))

    out = jax.block_until_ready(vanilla_mlp(x, weights, tile_n=512))
    ref = jax.block_until_ready(vanilla_mlp_ref(x, weights))

    # Loose-ish tolerance: MXU f32 matmul precision may differ slightly from
    # the XLA reference dot path; structural errors would be orders larger.
    np.testing.assert_allclose(np.asarray(out), np.asarray(ref),
                               rtol=2e-2, atol=2e-2)
    assert out.shape == (n_points, DIM_OUT)

    print("KERNEL_OK")
</pallas_src>

<mosaic_0001>
module attributes {stable_mosaic.version = 11 : i64} {
  func.func @_vanilla_mlp_kernel(%arg0: i32, %arg1: memref<512x51xf32, #tpu.memory_space<vmem>>, %arg2: memref<51x64xf32, #tpu.memory_space<vmem>>, %arg3: memref<64x64xf32, #tpu.memory_space<vmem>>, %arg4: memref<64x13xf32, #tpu.memory_space<vmem>>, %arg5: memref<512x13xf32, #tpu.memory_space<vmem>>) attributes {dimension_semantics = [#tpu.dimension_semantics<parallel>], iteration_bounds = array<i64: 2>, scalar_prefetch = 0 : i64, scratch_operands = 0 : i64, tpu.core_type = #tpu.core_type<tc>, window_params = [{transform_indices = @transform_0, window_bounds = array<i64: 512, 51>}, {pipeline_mode = #tpu.pipeline_mode<synchronous>, transform_indices = @transform_1, window_bounds = array<i64: 51, 64>}, {pipeline_mode = #tpu.pipeline_mode<synchronous>, transform_indices = @transform_2, window_bounds = array<i64: 64, 64>}, {pipeline_mode = #tpu.pipeline_mode<synchronous>, transform_indices = @transform_3, window_bounds = array<i64: 64, 13>}, {transform_indices = @transform_4, window_bounds = array<i64: 512, 13>}]} {
    %c0 = arith.constant 0 : index
    %c0_0 = arith.constant 0 : index
    %0 = vector.load %arg1[%c0, %c0_0] : memref<512x51xf32, #tpu.memory_space<vmem>>, vector<512x51xf32>
    %c0_1 = arith.constant 0 : index
    %c0_2 = arith.constant 0 : index
    %1 = vector.load %arg2[%c0_1, %c0_2] : memref<51x64xf32, #tpu.memory_space<vmem>>, vector<51x64xf32>
    %cst = arith.constant dense<0.000000e+00> : vector<512x64xf32>
    %2 = tpu.matmul %0, %1, %cst {dimension_numbers = #tpu.dot_dimension_numbers<[1], [0], [0], [1], [0, 0, 1, 1], [], []>} : vector<512x51xf32>, vector<51x64xf32>, vector<512x64xf32> -> vector<512x64xf32>
    %cst_3 = arith.constant 0.000000e+00 : f32
    %3 = vector.broadcast %cst_3 : f32 to vector<512x64xf32>
    %4 = arith.maximumf %2, %3 : vector<512x64xf32>
    %c0_4 = arith.constant 0 : index
    %c0_5 = arith.constant 0 : index
    %5 = vector.load %arg3[%c0_4, %c0_5] : memref<64x64xf32, #tpu.memory_space<vmem>>, vector<64x64xf32>
    %cst_6 = arith.constant dense<0.000000e+00> : vector<512x64xf32>
    %6 = tpu.matmul %4, %5, %cst_6 {dimension_numbers = #tpu.dot_dimension_numbers<[1], [0], [0], [1], [0, 0, 1, 1], [], []>} : vector<512x64xf32>, vector<64x64xf32>, vector<512x64xf32> -> vector<512x64xf32>
    %cst_7 = arith.constant 0.000000e+00 : f32
    %7 = vector.broadcast %cst_7 : f32 to vector<512x64xf32>
    %8 = arith.maximumf %6, %7 : vector<512x64xf32>
    %c0_8 = arith.constant 0 : index
    %c0_9 = arith.constant 0 : index
    %9 = vector.load %arg4[%c0_8, %c0_9] : memref<64x13xf32, #tpu.memory_space<vmem>>, vector<64x13xf32>
    %cst_10 = arith.constant dense<0.000000e+00> : vector<512x13xf32>
    %10 = tpu.matmul %8, %9, %cst_10 {dimension_numbers = #tpu.dot_dimension_numbers<[1], [0], [0], [1], [0, 0, 1, 1], [], []>} : vector<512x64xf32>, vector<64x13xf32>, vector<512x13xf32> -> vector<512x13xf32>
    %c0_11 = arith.constant 0 : index
    %c0_12 = arith.constant 0 : index
    %11 = vector.load %arg5[%c0_11, %c0_12] : memref<512x13xf32, #tpu.memory_space<vmem>>, vector<512x13xf32>
    tpu.vector_store %arg5[%c0_11, %c0_12], %10 {strides = array<i32>} : memref<512x13xf32, #tpu.memory_space<vmem>>, vector<512x13xf32>,
    return
  }
  func.func @transform_0(%arg0: i32) -> (i32, i32) {
    %c0_i32 = arith.constant 0 : i32
    %c0_i32_0 = arith.constant 0 : i32
    return %arg0, %c0_i32 : i32, i32
  }
  func.func @transform_1(%arg0: i32) -> (i32, i32) {
    %c0_i32 = arith.constant 0 : i32
    %c0_i32_0 = arith.constant 0 : i32
    %c0_i32_1 = arith.constant 0 : i32
    return %c0_i32, %c0_i32_0 : i32, i32
  }
  func.func @transform_2(%arg0: i32) -> (i32, i32) {
    %c0_i32 = arith.constant 0 : i32
    %c0_i32_0 = arith.constant 0 : i32
    %c0_i32_1 = arith.constant 0 : i32
    return %c0_i32, %c0_i32_0 : i32, i32
  }
  func.func @transform_3(%arg0: i32) -> (i32, i32) {
    %c0_i32 = arith.constant 0 : i32
    %c0_i32_0 = arith.constant 0 : i32
    %c0_i32_1 = arith.constant 0 : i32
    return %c0_i32, %c0_i32_0 : i32, i32
  }
  func.func @transform_4(%arg0: i32) -> (i32, i32) {
    %c0_i32 = arith.constant 0 : i32
    %c0_i32_0 = arith.constant 0 : i32
    return %arg0, %c0_i32 : i32, i32
  }
}

</mosaic_0001>

<llo_original>
// kernel: tpu_custom_call.1
$region0: #{tpu_custom_call.1}
  #allocation0 [shape = 'u32[]', space=smem, size = 0x4, offset = 0x4, fixed_abs, tag = 'smem constant byte address 0x4 - core index']
  #allocation1 [shape = 'u32[144,128]{1,0:T(1,128)}', space=vmem, size = 0x12000, scoped, tag = 'internal scratch']
  %s0 = inlined_call_operand.vmem [shape: f32[1024,51], index: 0, kind: input, shape index: {}]
  %s1 = inlined_call_operand.vmem [shape: f32[51,64], index: 1, kind: input, shape index: {}]
  %s2 = inlined_call_operand.vmem [shape: f32[64,64], index: 2, kind: input, shape index: {}]
  %s3 = inlined_call_operand.vmem [shape: f32[64,13], index: 3, kind: input, shape index: {}]
  %s4 = inlined_call_operand.vmem [shape: f32[1024,13], index: 4, kind: output, shape index: {}]
  %s5 = sld [smem:[#allocation0]]
  $region49: #{tpu_custom_call.1} parent=0
    _
  %s7 = ssub.s32 1, %s5
  %s8 = scalar_select 0, %s7, %s5
  loop: start=0, step=1, limit=4
  $region2: #{tpu_custom_call.1} parent=0 // loop_pre_header
    _
  $region3: #{tpu_custom_call.1} parent=0 // loop_header
    %s10 = sphi 0, %s14
    %p11 = scmp.ge.s32.totalorder %s10, 4
    %s20 = sphi 0, %s22
    %s23 = sphi 0, %s20
    %s24 = sphi 0, %s23
    %s40 = sphi 0, %s24
    %s44 = sphi 0, %s44
    %s46 = sphi 0, %s44
    %s47 = sphi 0, %s46
    %s61 = sphi 0, %s47
    %s65 = sphi 0, %s65
    %s67 = sphi 0, %s65
    %s68 = sphi 0, %s67
    %s82 = sphi 0, %s68
    %s86 = sphi 0, %s86
    %s88 = sphi 0, %s86
    %s89 = sphi 0, %s88
    %s103 = sphi 0, %s89
    %s109 = sphi 0, %s111
    %s112 = sphi 0, %s109
    %s113 = sphi 0, %s112
    %s129 = sphi 0, %s113
  $region4: #{tpu_custom_call.1} parent=0 // loop_header_branch
    %13 = sbr.rel (%p11) target = $region8
  $region5: #{tpu_custom_call.1} parent=0 // loop_body
    %s15 = ssub.s32 %s10, 1
    %s16 = ssub.s32 %s10, 2
    %s17 = sadd.s32 %s10, 1
    %s18 = ssub.s32 %s10, %s17
    %p19 = scmp.eq.s32.totalorder %s18, 0
    %s21 = sadd.s32 %s20, 1
    %s22 = scalar_select %p19, %s20, %s21
    %p25 = pneg %p19
    %p26 = scmp.eq.s32.totalorder %s10, 1
    %p27 = por %p25, %p26
    %p28 = scmp.ne.s32.totalorder %s20, %s23
    %p29 = scmp.eq.s32.totalorder %s10, 0
    %p30 = por %p28, %p29
    %p31 = scmp.ne.s32.totalorder %s20, %s23
    %p32 = scmp.eq.s32.totalorder %s15, 1
    %p33 = por %p31, %p32
    %p34 = scmp.ne.s32.totalorder %s23, %s24
    %p35 = scmp.eq.s32.totalorder %s15, 0
    %p36 = por %p34, %p35
    %p37 = scmp.ne.s32.totalorder %s23, %s24
    %p38 = scmp.eq.s32.totalorder %s16, 1
    %p39 = por %p37, %p38
    %p41 = scmp.ne.s32.totalorder %s24, %s40
    %p42 = scmp.eq.s32.totalorder %s16, 0
    %p43 = por %p41, %p42
    %s45 = sadd.s32 %s44, 1
    %p48 = scmp.eq.s32.totalorder %s10, 1
    %p49 = scmp.ne.s32.totalorder %s44, %s46
    %p50 = scmp.eq.s32.totalorder %s10, 0
    %p51 = por %p49, %p50
    %p52 = scmp.ne.s32.totalorder %s44, %s46
    %p53 = scmp.eq.s32.totalorder %s15, 1
    %p54 = por %p52, %p53
    %p55 = scmp.ne.s32.totalorder %s46, %s47
    %p56 = scmp.eq.s32.totalorder %s15, 0
    %p57 = por %p55, %p56
    %p58 = scmp.ne.s32.totalorder %s46, %s47
    %p59 = scmp.eq.s32.totalorder %s16, 1
    %p60 = por %p58, %p59
    %p62 = scmp.ne.s32.totalorder %s47, %s61
    %p63 = scmp.eq.s32.totalorder %s16, 0
    %p64 = por %p62, %p63
    %s66 = sadd.s32 %s65, 1
    %p69 = scmp.eq.s32.totalorder %s10, 1
    %p70 = scmp.ne.s32.totalorder %s65, %s67
    %p71 = scmp.eq.s32.totalorder %s10, 0
    %p72 = por %p70, %p71
    %p73 = scmp.ne.s32.totalorder %s65, %s67
    %p74 = scmp.eq.s32.totalorder %s15, 1
    %p75 = por %p73, %p74
    %p76 = scmp.ne.s32.totalorder %s67, %s68
    %p77 = scmp.eq.s32.totalorder %s15, 0
    %p78 = por %p76, %p77
    %p79 = scmp.ne.s32.totalorder %s67, %s68
    %p80 = scmp.eq.s32.totalorder %s16, 1
    %p81 = por %p79, %p80
    %p83 = scmp.ne.s32.totalorder %s68, %s82
    %p84 = scmp.eq.s32.totalorder %s16, 0
    %p85 = por %p83, %p84
    %s87 = sadd.s32 %s86, 1
    %p90 = scmp.eq.s32.totalorder %s10, 1
    %p91 = scmp.ne.s32.totalorder %s86, %s88
    %p92 = scmp.eq.s32.totalorder %s10, 0
    %p93 = por %p91, %p92
    %p94 = scmp.ne.s32.totalorder %s86, %s88
    %p95 = scmp.eq.s32.totalorder %s15, 1
    %p96 = por %p94, %p95
    %p97 = scmp.ne.s32.totalorder %s88, %s89
    %p98 = scmp.eq.s32.totalorder %s15, 0
    %p99 = por %p97, %p98
    %p100 = scmp.ne.s32.totalorder %s88, %s89
    %p101 = scmp.eq.s32.totalorder %s16, 1
    %p102 = por %p100, %p101
    %p104 = scmp.ne.s32.totalorder %s89, %s103
    %p105 = scmp.eq.s32.totalorder %s16, 0
    %p106 = por %p104, %p105
    %s107 = ssub.s32 %s10, %s17
    %p108 = scmp.eq.s32.totalorder %s107, 0
    %s110 = sadd.s32 %s109, 1
    %s111 = scalar_select %p108, %s109, %s110
    %p114 = pneg %p108
    %p115 = scmp.eq.s32.totalorder %s10, 1
    %p116 = por %p114, %p115
    %p117 = scmp.ne.s32.totalorder %s109, %s112
    %p118 = scmp.eq.s32.totalorder %s10, 0
    %p119 = por %p117, %p118
    %p120 = scmp.ne.s32.totalorder %s109, %s112
    %p121 = scmp.eq.s32.totalorder %s15, 1
    %p122 = por %p120, %p121
    %p123 = scmp.ne.s32.totalorder %s112, %s113
    %p124 = scmp.eq.s32.totalorder %s15, 0
    %p125 = por %p123, %p124
    %p126 = scmp.ne.s32.totalorder %s112, %s113
    %p127 = scmp.eq.s32.totalorder %s16, 1
    %p128 = por %p126, %p127
    %p130 = scmp.ne.s32.totalorder %s113, %s129
    %p131 = scmp.eq.s32.totalorder %s16, 0
    %p132 = por %p130, %p131
    %p133 = scmp.le.s32.totalorder 1, %s10
    %p134 = scmp.lt.s32.totalorder %s10, 3
    %p135 = pnand %p133, %p134
    %p136 = pneg %p135
    // Predicated region
    $region9: #{tpu_custom_call.1} parent=5 // pred_check
      _
    $region10: #{tpu_custom_call.1} parent=5 // pred_check_branch
      %138 = sbr.rel (%p135) target = $region12
    $region11: #{tpu_custom_call.1} parent=5 // pred_region
      %s139 = ssub.s32 %s10, 1
      // Predicated region
      $region13: #{tpu_custom_call.1} parent=11 // pred_check
        %p140 = pneg %p57
      $region14: #{tpu_custom_call.1} parent=11 // pred_check_branch
        %142 = sbr.rel (%p140) target = $region16
      $region15: #{tpu_custom_call.1} parent=11 // pred_region
        _
      $region16: #{tpu_custom_call.1} parent=11 // pred_fallthru
        _
      // Predicated region
      $region17: #{tpu_custom_call.1} parent=11 // pred_check
        %p143 = pneg %p78
      $region18: #{tpu_custom_call.1} parent=11 // pred_check_branch
        %145 = sbr.rel (%p143) target = $region20
      $region19: #{tpu_custom_call.1} parent=11 // pred_region
        _
      $region20: #{tpu_custom_call.1} parent=11 // pred_fallthru
        _
      // Predicated region
      $region21: #{tpu_custom_call.1} parent=11 // pred_check
        %p146 = pneg %p99
      $region22: #{tpu_custom_call.1} parent=11 // pred_check_branch
        %148 = sbr.rel (%p146) target = $region24
      $region23: #{tpu_custom_call.1} parent=11 // pred_region
        _
      $region24: #{tpu_custom_call.1} parent=11 // pred_fallthru
        _
    $region12: #{tpu_custom_call.1} parent=5 // pred_fallthru
      _
    %p149 = scmp.lt.s32.totalorder %s10, 2
    // Predicated region
    $region25: #{tpu_custom_call.1} parent=5 // pred_check
      %p150 = pneg %p149
    $region26: #{tpu_custom_call.1} parent=5 // pred_check_branch
      %152 = sbr.rel (%p150) target = $region28
    $region27: #{tpu_custom_call.1} parent=5 // pred_region
      // Predicated region
      $region29: #{tpu_custom_call.1} parent=27 // pred_check
        %p153 = pneg %p30
      $region30: #{tpu_custom_call.1} parent=27 // pred_check_branch
        %155 = sbr.rel (%p153) target = $region32
      $region31: #{tpu_custom_call.1} parent=27 // pred_region
        %s156 = smul.u32 64, %s10
        %p157 = scmp.lt.s32.totalorder %s156, 127
        %s158 = scalar_select %p157, %s156, 127
        %s159 = smul.addr %s158, 8
        %s160 = scalar_lea.vmem %s0, %s159
        %s161 = smul.u32 64, %s10
      $region32: #{tpu_custom_call.1} parent=27 // pred_fallthru
        _
    $region28: #{tpu_custom_call.1} parent=5 // pred_fallthru
      _
    %p162 = scmp.le.s32.totalorder 1, %s10
    %p163 = scmp.lt.s32.totalorder %s10, 3
    %p164 = pnand %p162, %p163
    %p165 = pneg %p164
    // Predicated region
    $region33: #{tpu_custom_call.1} parent=5 // pred_check
      _
    $region34: #{tpu_custom_call.1} parent=5 // pred_check_branch
      %167 = sbr.rel (%p164) target = $region36
    $region35: #{tpu_custom_call.1} parent=5 // pred_region
      %s168 = ssub.s32 %s10, 1
      %s169 = smul.u32 64, %s15
      %p170 = scmp.lt.s32.totalorder %s169, 127
      %s171 = scalar_select %p170, %s169, 127
      %s172 = smul.addr %s171, 8
      %s173 = scalar_lea.vmem %s0, %s172
      %p174 = pneg %p36
      %p175 = pneg %p33
      %p176 = pneg %p57
      %p177 = pneg %p54
      %p178 = pneg %p78
      %p179 = pneg %p75
      %p180 = pneg %p99
      %p181 = pneg %p96
      %p182 = pneg %p125
      %p183 = pneg %p122
      %s184 = smul.u32 64, %s15
      %p185 = scmp.lt.s32.totalorder %s184, 127
      %s186 = scalar_select %p185, %s184, 127
      %s187 = smul.addr %s186, 8
      %s188 = scalar_lea.vmem %s4, %s187
      %s189 = smul.u32 64, %s15
      %p190 = scmp.lt.s32.totalorder %s189, 127
      %s191 = scalar_select %p190, %s189, 127
      %s192 = smul.addr %s191, 8
      %s193 = scalar_lea.vmem %s0, %s192
      %s194 = smul.u32 64, %s15
      %s195 = smul.u32 64, %s15
      %p196 = scmp.lt.s32.totalorder %s195, 127
      %s197 = scalar_select %p196, %s195, 127
      %s198 = smul.addr %s197, 8
      %s199 = scalar_lea.vmem %s4, %s198
      %s200 = smul.u32 64, %s15
      %v201 = vld [vmem:[%s193] sm:$0xff]
      %v202 = vld [vmem:[%s193 + $0x8] sm:$0xff]
      %v203 = vld [vmem:[%s193 + $0x10] sm:$0xff]
      %v204 = vld [vmem:[%s193 + $0x18] sm:$0xff]
      %v205 = vld [vmem:[%s193 + $0x20] sm:$0xff]
      %v206 = vld [vmem:[%s193 + $0x28] sm:$0xff]
      %v207 = vld [vmem:[%s193 + $0x30] sm:$0xff]
      %v208 = vld [vmem:[%s193 + $0x38] sm:$0xff]
      %v209 = vld [vmem:[%s193 + $0x40] sm:$0xff]
      %v210 = vld [vmem:[%s193 + $0x48] sm:$0xff]
      %v211 = vld [vmem:[%s193 + $0x50] sm:$0xff]
      %v212 = vld [vmem:[%s193 + $0x58] sm:$0xff]
      %v213 = vld [vmem:[%s193 + $0x60] sm:$0xff]
      %v214 = vld [vmem:[%s193 + $0x68] sm:$0xff]
      %v215 = vld [vmem:[%s193 + $0x70] sm:$0xff]
      %v216 = vld [vmem:[%s193 + $0x78] sm:$0xff]
      %v217 = vld [vmem:[%s193 + $0x80] sm:$0xff]
      %v218 = vld [vmem:[%s193 + $0x88] sm:$0xff]
      %v219 = vld [vmem:[%s193 + $0x90] sm:$0xff]
      %v220 = vld [vmem:[%s193 + $0x98] sm:$0xff]
      %v221 = vld [vmem:[%s193 + $0xa0] sm:$0xff]
      %v222 = vld [vmem:[%s193 + $0xa8] sm:$0xff]
      %v223 = vld [vmem:[%s193 + $0xb0] sm:$0xff]
      %v224 = vld [vmem:[%s193 + $0xb8] sm:$0xff]
      %v225 = vld [vmem:[%s193 + $0xc0] sm:$0xff]
      %v226 = vld [vmem:[%s193 + $0xc8] sm:$0xff]
      %v227 = vld [vmem:[%s193 + $0xd0] sm:$0xff]
      %v228 = vld [vmem:[%s193 + $0xd8] sm:$0xff]
      %v229 = vld [vmem:[%s193 + $0xe0] sm:$0xff]
      %v230 = vld [vmem:[%s193 + $0xe8] sm:$0xff]
      %v231 = vld [vmem:[%s193 + $0xf0] sm:$0xff]
      %v232 = vld [vmem:[%s193 + $0xf8] sm:$0xff]
      %v233 = vld [vmem:[%s193 + $0x100] sm:$0xff]
      %v234 = vld [vmem:[%s193 + $0x108] sm:$0xff]
      %v235 = vld [vmem:[%s193 + $0x110] sm:$0xff]
      %v236 = vld [vmem:[%s193 + $0x118] sm:$0xff]
      %v237 = vld [vmem:[%s193 + $0x120] sm:$0xff]
      %v238 = vld [vmem:[%s193 + $0x128] sm:$0xff]
      %v239 = vld [vmem:[%s193 + $0x130] sm:$0xff]
      %v240 = vld [vmem:[%s193 + $0x138] sm:$0xff]
      %v241 = vld [vmem:[%s193 + $0x140] sm:$0xff]
      %v242 = vld [vmem:[%s193 + $0x148] sm:$0xff]
      %v243 = vld [vmem:[%s193 + $0x150] sm:$0xff]
      %v244 = vld [vmem:[%s193 + $0x158] sm:$0xff]
      %v245 = vld [vmem:[%s193 + $0x160] sm:$0xff]
      %v246 = vld [vmem:[%s193 + $0x168] sm:$0xff]
      %v247 = vld [vmem:[%s193 + $0x170] sm:$0xff]
      %v248 = vld [vmem:[%s193 + $0x178] sm:$0xff]
      %v249 = vld [vmem:[%s193 + $0x180] sm:$0xff]
      %v250 = vld [vmem:[%s193 + $0x188] sm:$0xff]
      %v251 = vld [vmem:[%s193 + $0x190] sm:$0xff]
      %v252 = vld [vmem:[%s193 + $0x198] sm:$0xff]
      %v253 = vld [vmem:[%s193 + $0x1a0] sm:$0xff]
      %v254 = vld [vmem:[%s193 + $0x1a8] sm:$0xff]
      %v255 = vld [vmem:[%s193 + $0x1b0] sm:$0xff]
      %v256 = vld [vmem:[%s193 + $0x1b8] sm:$0xff]
      %v257 = vld [vmem:[%s193 + $0x1c0] sm:$0xff]
      %v258 = vld [vmem:[%s193 + $0x1c8] sm:$0xff]
      %v259 = vld [vmem:[%s193 + $0x1d0] sm:$0xff]
      %v260 = vld [vmem:[%s193 + $0x1d8] sm:$0xff]
      %v261 = vld [vmem:[%s193 + $0x1e0] sm:$0xff]
      %v262 = vld [vmem:[%s193 + $0x1e8] sm:$0xff]
      %v263 = vld [vmem:[%s193 + $0x1f0] sm:$0xff]
      %v264 = vld [vmem:[%s193 + $0x1f8] sm:$0xff]
      %v265 = vld [vmem:[%s1] sm:$0xff]
      %v266 = vld [vmem:[%s1 + $0x8] sm:$0xff]
      %v267 = vld [vmem:[%s1 + $0x10] sm:$0xff]
      %v268 = vld [vmem:[%s1 + $0x18] sm:$0xff]
      %v269 = vld [vmem:[%s1 + $0x20] sm:$0xff]
      %v270 = vld [vmem:[%s1 + $0x28] sm:$0xff]
      %v271 = vld [vmem:[%s1 + $0x30] sm:$0x7]
      %vm272 = vcmask 416768
      %v274 = vsel %vm272, %v201, 0
      %v277 = vsel %vm272, %v202, 0
      %v280 = vsel %vm272, %v203, 0
      %v283 = vsel %vm272, %v204, 0
      %v286 = vsel %vm272, %v205, 0
      %v289 = vsel %vm272, %v206, 0
      %v292 = vsel %vm272, %v207, 0
      %v295 = vsel %vm272, %v208, 0
      %v298 = vsel %vm272, %v209, 0
      %v301 = vsel %vm272, %v210, 0
      %v304 = vsel %vm272, %v211, 0
      %v307 = vsel %vm272, %v212, 0
      %v310 = vsel %vm272, %v213, 0
      %v313 = vsel %vm272, %v214, 0
      %v316 = vsel %vm272, %v215, 0
      %v319 = vsel %vm272, %v216, 0
      %v322 = vsel %vm272, %v217, 0
      %v325 = vsel %vm272, %v218, 0
      %v328 = vsel %vm272, %v219, 0
      %v331 = vsel %vm272, %v220, 0
      %v334 = vsel %vm272, %v221, 0
      %v337 = vsel %vm272, %v222, 0
      %v340 = vsel %vm272, %v223, 0
      %v343 = vsel %vm272, %v224, 0
      %v346 = vsel %vm272, %v225, 0
      %v349 = vsel %vm272, %v226, 0
      %v352 = vsel %vm272, %v227, 0
      %v355 = vsel %vm272, %v228, 0
      %v358 = vsel %vm272, %v229, 0
      %v361 = vsel %vm272, %v230, 0
      %v364 = vsel %vm272, %v231, 0
      %v367 = vsel %vm272, %v232, 0
      %v370 = vsel %vm272, %v233, 0
      %v373 = vsel %vm272, %v234, 0
      %v376 = vsel %vm272, %v235, 0
      %v379 = vsel %vm272, %v236, 0
      %v382 = vsel %vm272, %v237, 0
      %v385 = vsel %vm272, %v238, 0
      %v388 = vsel %vm272, %v239, 0
      %v391 = vsel %vm272, %v240, 0
      %v394 = vsel %vm272, %v241, 0
      %v397 = vsel %vm272, %v242, 0
      %v400 = vsel %vm272, %v243, 0
      %v403 = vsel %vm272, %v244, 0
      %v406 = vsel %vm272, %v245, 0
      %v409 = vsel %vm272, %v246, 0
      %v412 = vsel %vm272, %v247, 0
      %v415 = vsel %vm272, %v248, 0
      %v418 = vsel %vm272, %v249, 0
      %v421 = vsel %vm272, %v250, 0
      %v424 = vsel %vm272, %v251, 0
      %v427 = vsel %vm272, %v252, 0
      %v430 = vsel %vm272, %v253, 0
      %v433 = vsel %vm272, %v254, 0
      %v436 = vsel %vm272, %v255, 0
      %v439 = vsel %vm272, %v256, 0
      %v442 = vsel %vm272, %v257, 0
      %v445 = vsel %vm272, %v258, 0
      %v448 = vsel %vm272, %v259, 0
      %v451 = vsel %vm272, %v260, 0
      %v454 = vsel %vm272, %v261, 0
      %v457 = vsel %vm272, %v262, 0
      %v460 = vsel %vm272, %v263, 0
      %v463 = vsel %vm272, %v264, 0
      %vm465 = vcmask 1042432
      %v467 = vsel %vm465, %v271, 0
      %469 = vmatprep.subr.mxu0 0.0
      %470 = vmatpush1.msra.mxu0 %v265
      %471 = vmatprep.subr.mxu0 0.0
      %472 = vmatpush1.msra.mxu0 %v266
      %473 = vmatprep.subr.mxu0 0.0
      %474 = vmatpush1.msra.mxu0 %v267
      %475 = vmatprep.subr.mxu0 0.0
      %476 = vmatpush1.msra.mxu0 %v268
      %477 = vmatprep.subr.mxu0 0.0
      %478 = vmatpush1.msra.mxu0 %v269
      %479 = vmatprep.subr.mxu0 0.0
      %480 = vmatpush1.msra.mxu0 %v270
      %481 = vmatprep.subr.mxu0 0.0
      %482 = vmatpush1.msra.mxu0 %v467
      %483 = vmatprep.subr.mxu0 0.0
      %484 = vmatpush1.msra.mxu0 0.0
      %485 = vmatprep.subr.mxu0 0.0
      %486 = vmatpush1.msra.mxu0 0.0
      %487 = vmatprep.subr.mxu0 0.0
      %488 = vmatpush1.msra.mxu0 0.0
      %489 = vmatprep.subr.mxu0 0.0
      %490 = vmatpush1.msra.mxu0 0.0
      %491 = vmatprep.subr.mxu0 0.0
      %492 = vmatpush1.msra.mxu0 0.0
      %493 = vmatprep.subr.mxu0 0.0
      %494 = vmatpush1.msra.mxu0 0.0
      %495 = vmatprep.subr.mxu0 0.0
      %496 = vmatpush1.msra.mxu0 0.0
      %497 = vmatprep.subr.mxu0 0.0
      %498 = vmatpush1.msra.mxu0 0.0
      %499 = vmatprep.subr.mxu0 0.0
      %500 = vmatpush1.msra.mxu0 0.0
      %501 = vmatprep.subr.mxu0 0.0
      %502 = vmatpush1.msra.mxu0 0.0
      %503 = vmatprep.subr.mxu0 0.0
      %504 = vmatpush1.msra.mxu0 0.0
      %505 = vmatprep.subr.mxu0 0.0
      %506 = vmatpush1.msra.mxu0 0.0
      %507 = vmatprep.subr.mxu0 0.0
      %508 = vmatpush1.msra.mxu0 0.0
      %509 = vmatprep.subr.mxu0 0.0
      %510 = vmatpush1.msra.mxu0 0.0
      %511 = vmatprep.subr.mxu0 0.0
      %512 = vmatpush1.msra.mxu0 0.0
      %513 = vmatprep.subr.mxu0 0.0
      %514 = vmatpush1.msra.mxu0 0.0
      %515 = vmatprep.subr.mxu0 0.0
      %516 = vmatpush1.msra.mxu0 0.0
      %517 = vmatprep.subr.mxu0 0.0
      %518 = vmatpush1.msra.mxu0 0.0
      %519 = vmatprep.subr.mxu0 0.0
      %520 = vmatpush1.msra.mxu0 0.0
      %521 = vmatprep.subr.mxu0 0.0
      %522 = vmatpush1.msra.mxu0 0.0
      %523 = vmatprep.subr.mxu0 0.0
      %524 = vmatpush1.msra.mxu0 0.0
      %525 = vmatprep.subr.mxu0 0.0
      %526 = vmatpush1.msra.mxu0 0.0
      %527 = vmatprep.subr.mxu0 0.0
      %528 = vmatpush1.msra.mxu0 0.0
      %529 = vmatprep.subr.mxu0 0.0
      %530 = vmatpush1.msra.mxu0 0.0
      %531 = vmatprep.subr.mxu0 0.0
      %532 = vmatpush1.msra.mxu0 0.0
      %533 = vmatprep.mubr.f32.mxu0 0.0
      %534 = vmatmul.mubr.f32.gmra.mrb[0].mxu0 %v274
      %v535 = vpop.f32.mrb[0].mxu0
      %v536 = vadd.f32 0.0, %v535
      %v537 = vpop.f32.mrb[0].mxu0
      %538 = vmatprep.mubr.f32.mxu0 0.0
      %539 = vmatmul.mubr.f32.gmra.mrb[0].mxu0 %v277
      %v540 = vpop.f32.mrb[0].mxu0
      %v541 = vadd.f32 0.0, %v540
      %v542 = vpop.f32.mrb[0].mxu0
      %543 = vmatprep.mubr.f32.mxu0 0.0
      %544 = vmatmul.mubr.f32.gmra.mrb[0].mxu0 %v280
      %v545 = vpop.f32.mrb[0].mxu0
      %v546 = vadd.f32 0.0, %v545
      %v547 = vpop.f32.mrb[0].mxu0
      %548 = vmatprep.mubr.f32.mxu0 0.0
      %549 = vmatmul.mubr.f32.gmra.mrb[0].mxu0 %v283
      %v550 = vpop.f32.mrb[0].mxu0
      %v551 = vadd.f32 0.0, %v550
      %v552 = vpop.f32.mrb[0].mxu0
      %553 = vmatprep.mubr.f32.mxu0 0.0
      %554 = vmatmul.mubr.f32.gmra.mrb[0].mxu0 %v286
      %v555 = vpop.f32.mrb[0].mxu0
      %v556 = vadd.f32 0.0, %v555
      %v557 = vpop.f32.mrb[0].mxu0
      %558 = vmatprep.mubr.f32.mxu0 0.0
      %559 = vmatmul.mubr.f32.gmra.mrb[0].mxu0 %v289
      %v560 = vpop.f32.mrb[0].mxu0
      %v561 = vadd.f32 0.0, %v560
      %v562 = vpop.f32.mrb[0].mxu0
      %563 = vmatprep.mubr.f32.mxu0 0.0
      %564 = vmatmul.mubr.f32.gmra.mrb[0].mxu0 %v292
      %v565 = vpop.f32.mrb[0].mxu0
      %v566 = vadd.f32 0.0, %v565
      %v567 = vpop.f32.mrb[0].mxu0
      %568 = vmatprep.mubr.f32.mxu0 0.0
      %569 = vmatmul.mubr.f32.gmra.mrb[0].mxu0 %v295
      %v570 = vpop.f32.mrb[0].mxu0
      %v571 = vadd.f32 0.0, %v570
      %v572 = vpop.f32.mrb[0].mxu0
      %573 = vmatprep.mubr.f32.mxu0 0.0
      %574 = vmatmul.mubr.f32.gmra.mrb[0].mxu0 %v298
      %v575 = vpop.f32.mrb[0].mxu0
      %v576 = vadd.f32 0.0, %v575
      %v577 = vpop.f32.mrb[0].mxu0
      %578 = vmatprep.mubr.f32.mxu0 0.0
      %579 = vmatmul.mubr.f32.gmra.mrb[0].mxu0 %v301
      %v580 = vpop.f32.mrb[0].mxu0
      %v581 = vadd.f32 0.0, %v580
      %v582 = vpop.f32.mrb[0].mxu0
      %583 = vmatprep.mubr.f32.mxu0 0.0
      %584 = vmatmul.mubr.f32.gmra.mrb[0].mxu0 %v304
      %v585 = vpop.f32.mrb[0].mxu0
      %v586 = vadd.f32 0.0, %v585
      %v587 = vpop.f32.mrb[0].mxu0
      %588 = vmatprep.mubr.f32.mxu0 0.0
      %589 = vmatmul.mubr.f32.gmra.mrb[0].mxu0 %v307
      %v590 = vpop.f32.mrb[0].mxu0
      %v591 = vadd.f32 0.0, %v590
      %v592 = vpop.f32.mrb[0].mxu0
      %593 = vmatprep.mubr.f32.mxu0 0.0
      %594 = vmatmul.mubr.f32.gmra.mrb[0].mxu0 %v310
      %v595 = vpop.f32.mrb[0].mxu0
      %v596 = vadd.f32 0.0, %v595
      %v597 = vpop.f32.mrb[0].mxu0
      %598 = vmatprep.mubr.f32.mxu0 0.0
      %599 = vmatmul.mubr.f32.gmra.mrb[0].mxu0 %v313
      %v600 = vpop.f32.mrb[0].mxu0
      %v601 = vadd.f32 0.0, %v600
      %v602 = vpop.f32.mrb[0].mxu0
      %603 = vmatprep.mubr.f32.mxu0 0.0
      %604 = vmatmul.mubr.f32.gmra.mrb[0].mxu0 %v316
      %v605 = vpop.f32.mrb[0].mxu0
      %v606 = vadd.f32 0.0, %v605
      %v607 = vpop.f32.mrb[0].mxu0
      %608 = vmatprep.mubr.f32.mxu0 0.0
      %609 = vmatmul.mubr.f32.gmra.mrb[0].mxu0 %v319
      %v610 = vpop.f32.mrb[0].mxu0
      %v611 = vadd.f32 0.0, %v610
      %v612 = vpop.f32.mrb[0].mxu0
      %613 = vmatprep.mubr.f32.mxu0 0.0
      %614 = vmatmul.mubr.f32.gmra.mrb[0].mxu0 %v322
      %v615 = vpop.f32.mrb[0].mxu0
      %v616 = vadd.f32 0.0, %v615
      %v617 = vpop.f32.mrb[0].mxu0
      %618 = vmatprep.mubr.f32.mxu0 0.0
      %619 = vmatmul.mubr.f32.gmra.mrb[0].mxu0 %v325
      %v620 = vpop.f32.mrb[0].mxu0
      %v621 = vadd.f32 0.0, %v620
      %v622 = vpop.f32.mrb[0].mxu0
      %623 = vmatprep.mubr.f32.mxu0 0.0
      %624 = vmatmul.mubr.f32.gmra.mrb[0].mxu0 %v328
      %v625 = vpop.f32.mrb[0].mxu0
      %v626 = vadd.f32 0.0, %v625
      %v627 = vpop.f32.mrb[0].mxu0
      %628 = vmatprep.mubr.f32.mxu0 0.0
      %629 = vmatmul.mubr.f32.gmra.mrb[0].mxu0 %v331
      %v630 = vpop.f32.mrb[0].mxu0
      %v631 = vadd.f32 0.0, %v630
      %v632 = vpop.f32.mrb[0].mxu0
      %633 = vmatprep.mubr.f32.mxu0 0.0
      %634 = vmatmul.mubr.f32.gmra.mrb[0].mxu0 %v334
      %v635 = vpop.f32.mrb[0].mxu0
      %v636 = vadd.f32 0.0, %v635
      %v637 = vpop.f32.mrb[0].mxu0
      %638 = vmatprep.mubr.f32.mxu0 0.0
      %639 = vmatmul.mubr.f32.gmra.mrb[0].mxu0 %v337
      %v640 = vpop.f32.mrb[0].mxu0
      %v641 = vadd.f32 0.0, %v640
      %v642 = vpop.f32.mrb[0].mxu0
      %643 = vmatprep.mubr.f32.mxu0 0.0
      %644 = vmatmul.mubr.f32.gmra.mrb[0].mxu0 %v340
      %v645 = vpop.f32.mrb[0].mxu0
      %v646 = vadd.f32 0.0, %v645
      %v647 = vpop.f32.mrb[0].mxu0
      %648 = vmatprep.mubr.f32.mxu0 0.0
      %649 = vmatmul.mubr.f32.gmra.mrb[0].mxu0 %v343
      %v650 = vpop.f32.mrb[0].mxu0
      %v651 = vadd.f32 0.0, %v650
      %v652 = vpop.f32.mrb[0].mxu0
      %653 = vmatprep.mubr.f32.mxu0 0.0
      %654 = vmatmul.mubr.f32.gmra.mrb[0].mxu0 %v346
      %v655 = vpop.f32.mrb[0].mxu0
      %v656 = vadd.f32 0.0, %v655
      %v657 = vpop.f32.mrb[0].mxu0
      %658 = vmatprep.mubr.f32.mxu0 0.0
      %659 = vmatmul.mubr.f32.gmra.mrb[0].mxu0 %v349
      %v660 = vpop.f32.mrb[0].mxu0
      %v661 = vadd.f32 0.0, %v660
      %v662 = vpop.f32.mrb[0].mxu0
      %663 = vmatprep.mubr.f32.mxu0 0.0
      %664 = vmatmul.mubr.f32.gmra.mrb[0].mxu0 %v352
      %v665 = vpop.f32.mrb[0].mxu0
      %v666 = vadd.f32 0.0, %v665
      %v667 = vpop.f32.mrb[0].mxu0
      %668 = vmatprep.mubr.f32.mxu0 0.0
      %669 = vmatmul.mubr.f32.gmra.mrb[0].mxu0 %v355
      %v670 = vpop.f32.mrb[0].mxu0
      %v671 = vadd.f32 0.0, %v670
      %v672 = vpop.f32.mrb[0].mxu0
      %673 = vmatprep.mubr.f32.mxu0 0.0
      %674 = vmatmul.mubr.f32.gmra.mrb[0].mxu0 %v358
      %v675 = vpop.f32.mrb[0].mxu0
      %v676 = vadd.f32 0.0, %v675
      %v677 = vpop.f32.mrb[0].mxu0
      %678 = vmatprep.mubr.f32.mxu0 0.0
      %679 = vmatmul.mubr.f32.gmra.mrb[0].mxu0 %v361
      %v680 = vpop.f32.mrb[0].mxu0
      %v681 = vadd.f32 0.0, %v680
      %v682 = vpop.f32.mrb[0].mxu0
      %683 = vmatprep.mubr.f32.mxu0 0.0
      %684 = vmatmul.mubr.f32.gmra.mrb[0].mxu0 %v364
      %v685 = vpop.f32.mrb[0].mxu0
      %v686 = vadd.f32 0.0, %v685
      %v687 = vpop.f32.mrb[0].mxu0
      %688 = vmatprep.mubr.f32.mxu0 0.0
      %689 = vmatmul.mubr.f32.gmra.mrb[0].mxu0 %v367
      %v690 = vpop.f32.mrb[0].mxu0
      %v691 = vadd.f32 0.0, %v690
      %v692 = vpop.f32.mrb[0].mxu0
      %693 = vmatprep.mubr.f32.mxu0 0.0
      %694 = vmatmul.mubr.f32.gmra.mrb[0].mxu0 %v370
      %v695 = vpop.f32.mrb[0].mxu0
      %v696 = vadd.f32 0.0, %v695
      %v697 = vpop.f32.mrb[0].mxu0
      %698 = vmatprep.mubr.f32.mxu0 0.0
      %699 = vmatmul.mubr.f32.gmra.mrb[0].mxu0 %v373
      %v700 = vpop.f32.mrb[0].mxu0
      %v701 = vadd.f32 0.0, %v700
      %v702 = vpop.f32.mrb[0].mxu0
      %703 = vmatprep.mubr.f32.mxu0 0.0
      %704 = vmatmul.mubr.f32.gmra.mrb[0].mxu0 %v376
      %v705 = vpop.f32.mrb[0].mxu0
      %v706 = vadd.f32 0.0, %v705
      %v707 = vpop.f32.mrb[0].mxu0
      %708 = vmatprep.mubr.f32.mxu0 0.0
      %709 = vmatmul.mubr.f32.gmra.mrb[0].mxu0 %v379
      %v710 = vpop.f32.mrb[0].mxu0
      %v711 = vadd.f32 0.0, %v710
      %v712 = vpop.f32.mrb[0].mxu0
      %713 = vmatprep.mubr.f32.mxu0 0.0
      %714 = vmatmul.mubr.f32.gmra.mrb[0].mxu0 %v382
      %v715 = vpop.f32.mrb[0].mxu0
      %v716 = vadd.f32 0.0, %v715
      %v717 = vpop.f32.mrb[0].mxu0
      %718 = vmatprep.mubr.f32.mxu0 0.0
      %719 = vmatmul.mubr.f32.gmra.mrb[0].mxu0 %v385
      %v720 = vpop.f32.mrb[0].mxu0
      %v721 = vadd.f32 0.0, %v720
      %v722 = vpop.f32.mrb[0].mxu0
      %723 = vmatprep.mubr.f32.mxu0 0.0
      %724 = vmatmul.mubr.f32.gmra.mrb[0].mxu0 %v388
      %v725 = vpop.f32.mrb[0].mxu0
      %v726 = vadd.f32 0.0, %v725
      %v727 = vpop.f32.mrb[0].mxu0
      %728 = vmatprep.mubr.f32.mxu0 0.0
      %729 = vmatmul.mubr.f32.gmra.mrb[0].mxu0 %v391
      %v730 = vpop.f32.mrb[0].mxu0
      %v731 = vadd.f32 0.0, %v730
      %v732 = vpop.f32.mrb[0].mxu0
      %733 = vmatprep.mubr.f32.mxu0 0.0
      %734 = vmatmul.mubr.f32.gmra.mrb[0].mxu0 %v394
      %v735 = vpop.f32.mrb[0].mxu0
      %v736 = vadd.f32 0.0, %v735
      %v737 = vpop.f32.mrb[0].mxu0
      %738 = vmatprep.mubr.f32.mxu0 0.0
      %739 = vmatmul.mubr.f32.gmra.mrb[0].mxu0 %v397
      %v740 = vpop.f32.mrb[0].mxu0
      %v741 = vadd.f32 0.0, %v740
      %v742 = vpop.f32.mrb[0].mxu0
      %743 = vmatprep.mubr.f32.mxu0 0.0
      %744 = vmatmul.mubr.f32.gmra.mrb[0].mxu0 %v400
      %v745 = vpop.f32.mrb[0].mxu0
      %v746 = vadd.f32 0.0, %v745
      %v747 = vpop.f32.mrb[0].mxu0
      %748 = vmatprep.mubr.f32.mxu0 0.0
      %749 = vmatmul.mubr.f32.gmra.mrb[0].mxu0 %v403
      %v750 = vpop.f32.mrb[0].mxu0
      %v751 = vadd.f32 0.0, %v750
      %v752 = vpop.f32.mrb[0].mxu0
      %753 = vmatprep.mubr.f32.mxu0 0.0
      %754 = vmatmul.mubr.f32.gmra.mrb[0].mxu0 %v406
      %v755 = vpop.f32.mrb[0].mxu0
      %v756 = vadd.f32 0.0, %v755
      %v757 = vpop.f32.mrb[0].mxu0
      %758 = vmatprep.mubr.f32.mxu0 0.0
      %759 = vmatmul.mubr.f32.gmra.mrb[0].mxu0 %v409
      %v760 = vpop.f32.mrb[0].mxu0
      %v761 = vadd.f32 0.0, %v760
      %v762 = vpop.f32.mrb[0].mxu0
      %763 = vmatprep.mubr.f32.mxu0 0.0
      %764 = vmatmul.mubr.f32.gmra.mrb[0].mxu0 %v412
      %v765 = vpop.f32.mrb[0].mxu0
      %v766 = vadd.f32 0.0, %v765
      %v767 = vpop.f32.mrb[0].mxu0
      %768 = vmatprep.mubr.f32.mxu0 0.0
      %769 = vmatmul.mubr.f32.gmra.mrb[0].mxu0 %v415
      %v770 = vpop.f32.mrb[0].mxu0
      %v771 = vadd.f32 0.0, %v770
      %v772 = vpop.f32.mrb[0].mxu0
      %773 = vmatprep.mubr.f32.mxu0 0.0
      %774 = vmatmul.mubr.f32.gmra.mrb[0].mxu0 %v418
      %v775 = vpop.f32.mrb[0].mxu0
      %v776 = vadd.f32 0.0, %v775
      %v777 = vpop.f32.mrb[0].mxu0
      %778 = vmatprep.mubr.f32.mxu0 0.0
      %779 = vmatmul.mubr.f32.gmra.mrb[0].mxu0 %v421
      %v780 = vpop.f32.mrb[0].mxu0
      %v781 = vadd.f32 0.0, %v780
      %v782 = vpop.f32.mrb[0].mxu0
      %783 = vmatprep.mubr.f32.mxu0 0.0
      %784 = vmatmul.mubr.f32.gmra.mrb[0].mxu0 %v424
      %v785 = vpop.f32.mrb[0].mxu0
      %v786 = vadd.f32 0.0, %v785
      %v787 = vpop.f32.mrb[0].mxu0
      %788 = vmatprep.mubr.f32.mxu0 0.0
      %789 = vmatmul.mubr.f32.gmra.mrb[0].mxu0 %v427
      %v790 = vpop.f32.mrb[0].mxu0
      %v791 = vadd.f32 0.0, %v790
      %v792 = vpop.f32.mrb[0].mxu0
      %793 = vmatprep.mubr.f32.mxu0 0.0
      %794 = vmatmul.mubr.f32.gmra.mrb[0].mxu0 %v430
      %v795 = vpop.f32.mrb[0].mxu0
      %v796 = vadd.f32 0.0, %v795
      %v797 = vpop.f32.mrb[0].mxu0
      %798 = vmatprep.mubr.f32.mxu0 0.0
      %799 = vmatmul.mubr.f32.gmra.mrb[0].mxu0 %v433
      %v800 = vpop.f32.mrb[0].mxu0
      %v801 = vadd.f32 0.0, %v800
      %v802 = vpop.f32.mrb[0].mxu0
      %803 = vmatprep.mubr.f32.mxu0 0.0
      %804 = vmatmul.mubr.f32.gmra.mrb[0].mxu0 %v436
      %v805 = vpop.f32.mrb[0].mxu0
      %v806 = vadd.f32 0.0, %v805
      %v807 = vpop.f32.mrb[0].mxu0
      %808 = vmatprep.mubr.f32.mxu0 0.0
      %809 = vmatmul.mubr.f32.gmra.mrb[0].mxu0 %v439
      %v810 = vpop.f32.mrb[0].mxu0
      %v811 = vadd.f32 0.0, %v810
      %v812 = vpop.f32.mrb[0].mxu0
      %813 = vmatprep.mubr.f32.mxu0 0.0
      %814 = vmatmul.mubr.f32.gmra.mrb[0].mxu0 %v442
      %v815 = vpop.f32.mrb[0].mxu0
      %v816 = vadd.f32 0.0, %v815
      %v817 = vpop.f32.mrb[0].mxu0
      %818 = vmatprep.mubr.f32.mxu0 0.0
      %819 = vmatmul.mubr.f32.gmra.mrb[0].mxu0 %v445
      %v820 = vpop.f32.mrb[0].mxu0
      %v821 = vadd.f32 0.0, %v820
      %v822 = vpop.f32.mrb[0].mxu0
      %823 = vmatprep.mubr.f32.mxu0 0.0
      %824 = vmatmul.mubr.f32.gmra.mrb[0].mxu0 %v448
      %v825 = vpop.f32.mrb[0].mxu0
      %v826 = vadd.f32 0.0, %v825
      %v827 = vpop.f32.mrb[0].mxu0
      %828 = vmatprep.mubr.f32.mxu0 0.0
      %829 = vmatmul.mubr.f32.gmra.mrb[0].mxu0 %v451
      %v830 = vpop.f32.mrb[0].mxu0
      %v831 = vadd.f32 0.0, %v830
      %v832 = vpop.f32.mrb[0].mxu0
      %833 = vmatprep.mubr.f32.mxu0 0.0
      %834 = vmatmul.mubr.f32.gmra.mrb[0].mxu0 %v454
      %v835 = vpop.f32.mrb[0].mxu0
      %v836 = vadd.f32 0.0, %v835
      %v837 = vpop.f32.mrb[0].mxu0
      %838 = vmatprep.mubr.f32.mxu0 0.0
      %839 = vmatmul.mubr.f32.gmra.mrb[0].mxu0 %v457
      %v840 = vpop.f32.mrb[0].mxu0
      %v841 = vadd.f32 0.0, %v840
      %v842 = vpop.f32.mrb[0].mxu0
      %843 = vmatprep.mubr.f32.mxu0 0.0
      %844 = vmatmul.mubr.f32.gmra.mrb[0].mxu0 %v460
      %v845 = vpop.f32.mrb[0].mxu0
      %v846 = vadd.f32 0.0, %v845
      %v847 = vpop.f32.mrb[0].mxu0
      %848 = vmatprep.mubr.f32.mxu0 0.0
      %849 = vmatmul.mubr.f32.gmra.mrb[0].mxu0 %v463
      %v850 = vpop.f32.mrb[0].mxu0
      %v851 = vadd.f32 0.0, %v850
      %v852 = vpop.f32.mrb[0].mxu0
      %853 = vdwg.mxu0
      %v854 = vmax.f32 %v536, 0.0
      %v855 = vmax.f32 %v541, 0.0
      %v856 = vmax.f32 %v546, 0.0
      %v857 = vmax.f32 %v551, 0.0
      %v858 = vmax.f32 %v556, 0.0
      %v859 = vmax.f32 %v561, 0.0
      %v860 = vmax.f32 %v566, 0.0
      %v861 = vmax.f32 %v571, 0.0
      %v862 = vmax.f32 %v576, 0.0
      %v863 = vmax.f32 %v581, 0.0
      %v864 = vmax.f32 %v586, 0.0
      %v865 = vmax.f32 %v591, 0.0
      %v866 = vmax.f32 %v596, 0.0
      %v867 = vmax.f32 %v601, 0.0
      %v868 = vmax.f32 %v606, 0.0
      %v869 = vmax.f32 %v611, 0.0
      %v870 = vmax.f32 %v616, 0.0
      %v871 = vmax.f32 %v621, 0.0
      %v872 = vmax.f32 %v626, 0.0
      %v873 = vmax.f32 %v631, 0.0
      %v874 = vmax.f32 %v636, 0.0
      %v875 = vmax.f32 %v641, 0.0
      %v876 = vmax.f32 %v646, 0.0
      %v877 = vmax.f32 %v651, 0.0
      %v878 = vmax.f32 %v656, 0.0
      %v879 = vmax.f32 %v661, 0.0
      %v880 = vmax.f32 %v666, 0.0
      %v881 = vmax.f32 %v671, 0.0
      %v882 = vmax.f32 %v676, 0.0
      %v883 = vmax.f32 %v681, 0.0
      %v884 = vmax.f32 %v686, 0.0
      %v885 = vmax.f32 %v691, 0.0
      %v886 = vmax.f32 %v696, 0.0
      %v887 = vmax.f32 %v701, 0.0
      %v888 = vmax.f32 %v706, 0.0
      %v889 = vmax.f32 %v711, 0.0
      %v890 = vmax.f32 %v716, 0.0
      %v891 = vmax.f32 %v721, 0.0
      %v892 = vmax.f32 %v726, 0.0
      %v893 = vmax.f32 %v731, 0.0
      %v894 = vmax.f32 %v736, 0.0
      %v895 = vmax.f32 %v741, 0.0
      %v896 = vmax.f32 %v746, 0.0
      %v897 = vmax.f32 %v751, 0.0
      %v898 = vmax.f32 %v756, 0.0
      %v899 = vmax.f32 %v761, 0.0
      %v900 = vmax.f32 %v766, 0.0
      %v901 = vmax.f32 %v771, 0.0
      %v902 = vmax.f32 %v776, 0.0
      %v903 = vmax.f32 %v781, 0.0
      %v904 = vmax.f32 %v786, 0.0
      %v905 = vmax.f32 %v791, 0.0
      %v906 = vmax.f32 %v796, 0.0
      %v907 = vmax.f32 %v801, 0.0
      %v908 = vmax.f32 %v806, 0.0
      %v909 = vmax.f32 %v811, 0.0
      %v910 = vmax.f32 %v816, 0.0
      %v911 = vmax.f32 %v821, 0.0
      %v912 = vmax.f32 %v826, 0.0
      %v913 = vmax.f32 %v831, 0.0
      %v914 = vmax.f32 %v836, 0.0
      %v915 = vmax.f32 %v841, 0.0
      %v916 = vmax.f32 %v846, 0.0
      %v917 = vmax.f32 %v851, 0.0
      %v918 = vld [vmem:[%s2] sm:$0xff]
      %v919 = vld [vmem:[%s2 + $0x8] sm:$0xff]
      %v920 = vld [vmem:[%s2 + $0x10] sm:$0xff]
      %v921 = vld [vmem:[%s2 + $0x18] sm:$0xff]
      %v922 = vld [vmem:[%s2 + $0x20] sm:$0xff]
      %v923 = vld [vmem:[%s2 + $0x28] sm:$0xff]
      %v924 = vld [vmem:[%s2 + $0x30] sm:$0xff]
      %v925 = vld [vmem:[%s2 + $0x38] sm:$0xff]
      %vm926 = vcmask 523264
      %v928 = vsel %vm926, %v854, 0
      %v931 = vsel %vm926, %v855, 0
      %v934 = vsel %vm926, %v856, 0
      %v937 = vsel %vm926, %v857, 0
      %v940 = vsel %vm926, %v858, 0
      %v943 = vsel %vm926, %v859, 0
      %v946 = vsel %vm926, %v860, 0
      %v949 = vsel %vm926, %v861, 0
      %v952 = vsel %vm926, %v862, 0
      %v955 = vsel %vm926, %v863, 0
      %v958 = vsel %vm926, %v864, 0
      %v961 = vsel %vm926, %v865, 0
      %v964 = vsel %vm926, %v866, 0
      %v967 = vsel %vm926, %v867, 0
      %v970 = vsel %vm926, %v868, 0
      %v973 = vsel %vm926, %v869, 0
      %v976 = vsel %vm926, %v870, 0
      %v979 = vsel %vm926, %v871, 0
      %v982 = vsel %vm926, %v872, 0
      %v985 = vsel %vm926, %v873, 0
      %v988 = vsel %vm926, %v874, 0
      %v991 = vsel %vm926, %v875, 0
      %v994 = vsel %vm926, %v876, 0
      %v997 = vsel %vm926, %v877, 0
      %v1000 = vsel %vm926, %v878, 0
      %v1003 = vsel %vm926, %v879, 0
      %v1006 = vsel %vm926, %v880, 0
      %v1009 = vsel %vm926, %v881, 0
      %v1012 = vsel %vm926, %v882, 0
      %v1015 = vsel %vm926, %v883, 0
      %v1018 = vsel %vm926, %v884, 0
      %v1021 = vsel %vm926, %v885, 0
      %v1024 = vsel %vm926, %v886, 0
      %v1027 = vsel %vm926, %v887, 0
      %v1030 = vsel %vm926, %v888, 0
      %v1033 = vsel %vm926, %v889, 0
      %v1036 = vsel %vm926, %v890, 0
      %v1039 = vsel %vm926, %v891, 0
      %v1042 = vsel %vm926, %v892, 0
      %v1045 = vsel %vm926, %v893, 0
      %v1048 = vsel %vm926, %v894, 0
      %v1051 = vsel %vm926, %v895, 0
      %v1054 = vsel %vm926, %v896, 0
      %v1057 = vsel %vm926, %v897, 0
      %v1060 = vsel %vm926, %v898, 0
      %v1063 = vsel %vm926, %v899, 0
      %v1066 = vsel %vm926, %v900, 0
      %v1069 = vsel %vm926, %v901, 0
      %v1072 = vsel %vm926, %v902, 0
      %v1075 = vsel %vm926, %v903, 0
      %v1078 = vsel %vm926, %v904, 0
      %v1081 = vsel %vm926, %v905, 0
      %v1084 = vsel %vm926, %v906, 0
      %v1087 = vsel %vm926, %v907, 0
      %v1090 = vsel %vm926, %v908, 0
      %v1093 = vsel %vm926, %v909, 0
      %v1096 = vsel %vm926, %v910, 0
      %v1099 = vsel %vm926, %v911, 0
      %v1102 = vsel %vm926, %v912, 0
      %v1105 = vsel %vm926, %v913, 0
      %v1108 = vsel %vm926, %v914, 0
      %v1111 = vsel %vm926, %v915, 0
      %v1114 = vsel %vm926, %v916, 0
      %v1117 = vsel %vm926, %v917, 0
      %1119 = vmatprep.subr.mxu0 0.0
      %1120 = vmatpush1.msra.mxu0 %v918
      %1121 = vmatprep.subr.mxu0 0.0
      %1122 = vmatpush1.msra.mxu0 %v919
      %1123 = vmatprep.subr.mxu0 0.0
      %1124 = vmatpush1.msra.mxu0 %v920
      %1125 = vmatprep.subr.mxu0 0.0
      %1126 = vmatpush1.msra.mxu0 %v921
      %1127 = vmatprep.subr.mxu0 0.0
      %1128 = vmatpush1.msra.mxu0 %v922
      %1129 = vmatprep.subr.mxu0 0.0
      %1130 = vmatpush1.msra.mxu0 %v923
      %1131 = vmatprep.subr.mxu0 0.0
      %1132 = vmatpush1.msra.mxu0 %v924
      %1133 = vmatprep.subr.mxu0 0.0
      %1134 = vmatpush1.msra.mxu0 %v925
      %1135 = vmatprep.subr.mxu0 0.0
      %1136 = vmatpush1.msra.mxu0 0.0
      %1137 = vmatprep.subr.mxu0 0.0
      %1138 = vmatpush1.msra.mxu0 0.0
      %1139 = vmatprep.subr.mxu0 0.0
      %1140 = vmatpush1.msra.mxu0 0.0
      %1141 = vmatprep.subr.mxu0 0.0
      %1142 = vmatpush1.msra.mxu0 0.0
      %1143 = vmatprep.subr.mxu0 0.0
      %1144 = vmatpush1.msra.mxu0 0.0
      %1145 = vmatprep.subr.mxu0 0.0
      %1146 = vmatpush1.msra.mxu0 0.0
      %1147 = vmatprep.subr.mxu0 0.0
      %1148 = vmatpush1.msra.mxu0 0.0
      %1149 = vmatprep.subr.mxu0 0.0
      %1150 = vmatpush1.msra.mxu0 0.0
      %1151 = vmatprep.subr.mxu0 0.0
      %1152 = vmatpush1.msra.mxu0 0.0
      %1153 = vmatprep.subr.mxu0 0.0
      %1154 = vmatpush1.msra.mxu0 0.0
      %1155 = vmatprep.subr.mxu0 0.0
      %1156 = vmatpush1.msra.mxu0 0.0
      %1157 = vmatprep.subr.mxu0 0.0
      %1158 = vmatpush1.msra.mxu0 0.0
      %1159 = vmatprep.subr.mxu0 0.0
      %1160 = vmatpush1.msra.mxu0 0.0
      %1161 = vmatprep.subr.mxu0 0.0
      %1162 = vmatpush1.msra.mxu0 0.0
      %1163 = vmatprep.subr.mxu0 0.0
      %1164 = vmatpush1.msra.mxu0 0.0
      %1165 = vmatprep.subr.mxu0 0.0
      %1166 = vmatpush1.msra.mxu0 0.0
      %1167 = vmatprep.subr.mxu0 0.0
      %1168 = vmatpush1.msra.mxu0 0.0
      %1169 = vmatprep.subr.mxu0 0.0
      %1170 = vmatpush1.msra.mxu0 0.0
      %1171 = vmatprep.subr.mxu0 0.0
      %1172 = vmatpush1.msra.mxu0 0.0
      %1173 = vmatprep.subr.mxu0 0.0
      %1174 = vmatpush1.msra.mxu0 0.0
      %1175 = vmatprep.subr.mxu0 0.0
      %1176 = vmatpush1.msra.mxu0 0.0
      %1177 = vmatprep.subr.mxu0 0.0
      %1178 = vmatpush1.msra.mxu0 0.0
      %1179 = vmatprep.subr.mxu0 0.0
      %1180 = vmatpush1.msra.mxu0 0.0
      %1181 = vmatprep.subr.mxu0 0.0
      %1182 = vmatpush1.msra.mxu0 0.0
      %1183 = vmatprep.mubr.f32.mxu0 0.0
      %1184 = vmatmul.mubr.f32.gmra.mrb[0].mxu0 %v928
      %v1185 = vpop.f32.mrb[0].mxu0
      %v1186 = vadd.f32 0.0, %v1185
      %v1187 = vpop.f32.mrb[0].mxu0
      %1188 = vmatprep.mubr.f32.mxu0 0.0
      %1189 = vmatmul.mubr.f32.gmra.mrb[0].mxu0 %v931
      %v1190 = vpop.f32.mrb[0].mxu0
      %v1191 = vadd.f32 0.0, %v1190
      %v1192 = vpop.f32.mrb[0].mxu0
      %1193 = vmatprep.mubr.f32.mxu0 0.0
      %1194 = vmatmul.mubr.f32.gmra.mrb[0].mxu0 %v934
      %v1195 = vpop.f32.mrb[0].mxu0
      %v1196 = vadd.f32 0.0, %v1195
      %v1197 = vpop.f32.mrb[0].mxu0
      %1198 = vmatprep.mubr.f32.mxu0 0.0
      %1199 = vmatmul.mubr.f32.gmra.mrb[0].mxu0 %v937
      %v1200 = vpop.f32.mrb[0].mxu0
      %v1201 = vadd.f32 0.0, %v1200
      %v1202 = vpop.f32.mrb[0].mxu0
      %1203 = vmatprep.mubr.f32.mxu0 0.0
      %1204 = vmatmul.mubr.f32.gmra.mrb[0].mxu0 %v940
      %v1205 = vpop.f32.mrb[0].mxu0
      %v1206 = vadd.f32 0.0, %v1205
      %v1207 = vpop.f32.mrb[0].mxu0
      %1208 = vmatprep.mubr.f32.mxu0 0.0
      %1209 = vmatmul.mubr.f32.gmra.mrb[0].mxu0 %v943
      %v1210 = vpop.f32.mrb[0].mxu0
      %v1211 = vadd.f32 0.0, %v1210
      %v1212 = vpop.f32.mrb[0].mxu0
      %1213 = vmatprep.mubr.f32.mxu0 0.0
      %1214 = vmatmul.mubr.f32.gmra.mrb[0].mxu0 %v946
      %v1215 = vpop.f32.mrb[0].mxu0
      %v1216 = vadd.f32 0.0, %v1215
      %v1217 = vpop.f32.mrb[0].mxu0
      %1218 = vmatprep.mubr.f32.mxu0 0.0
      %1219 = vmatmul.mubr.f32.gmra.mrb[0].mxu0 %v949
      %v1220 = vpop.f32.mrb[0].mxu0
      %v1221 = vadd.f32 0.0, %v1220
      %v1222 = vpop.f32.mrb[0].mxu0
      %1223 = vmatprep.mubr.f32.mxu0 0.0
      %1224 = vmatmul.mubr.f32.gmra.mrb[0].mxu0 %v952
      %v1225 = vpop.f32.mrb[0].mxu0
      %v1226 = vadd.f32 0.0, %v1225
      %v1227 = vpop.f32.mrb[0].mxu0
      %1228 = vmatprep.mubr.f32.mxu0 0.0
      %1229 = vmatmul.mubr.f32.gmra.mrb[0].mxu0 %v955
      %v1230 = vpop.f32.mrb[0].mxu0
      %v1231 = vadd.f32 0.0, %v1230
      %v1232 = vpop.f32.mrb[0].mxu0
      %1233 = vmatprep.mubr.f32.mxu0 0.0
      %1234 = vmatmul.mubr.f32.gmra.mrb[0].mxu0 %v958
      %v1235 = vpop.f32.mrb[0].mxu0
      %v1236 = vadd.f32 0.0, %v1235
      %v1237 = vpop.f32.mrb[0].mxu0
      %1238 = vmatprep.mubr.f32.mxu0 0.0
      %1239 = vmatmul.mubr.f32.gmra.mrb[0].mxu0 %v961
      %v1240 = vpop.f32.mrb[0].mxu0
      %v1241 = vadd.f32 0.0, %v1240
      %v1242 = vpop.f32.mrb[0].mxu0
      %1243 = vmatprep.mubr.f32.mxu0 0.0
      %1244 = vmatmul.mubr.f32.gmra.mrb[0].mxu0 %v964
      %v1245 = vpop.f32.mrb[0].mxu0
      %v1246 = vadd.f32 0.0, %v1245
      %v1247 = vpop.f32.mrb[0].mxu0
      %1248 = vmatprep.mubr.f32.mxu0 0.0
      %1249 = vmatmul.mubr.f32.gmra.mrb[0].mxu0 %v967
      %v1250 = vpop.f32.mrb[0].mxu0
      %v1251 = vadd.f32 0.0, %v1250
      %v1252 = vpop.f32.mrb[0].mxu0
      %1253 = vmatprep.mubr.f32.mxu0 0.0
      %1254 = vmatmul.mubr.f32.gmra.mrb[0].mxu0 %v970
      %v1255 = vpop.f32.mrb[0].mxu0
      %v1256 = vadd.f32 0.0, %v1255
      %v1257 = vpop.f32.mrb[0].mxu0
      %1258 = vmatprep.mubr.f32.mxu0 0.0
      %1259 = vmatmul.mubr.f32.gmra.mrb[0].mxu0 %v973
      %v1260 = vpop.f32.mrb[0].mxu0
      %v1261 = vadd.f32 0.0, %v1260
      %v1262 = vpop.f32.mrb[0].mxu0
      %1263 = vmatprep.mubr.f32.mxu0 0.0
      %1264 = vmatmul.mubr.f32.gmra.mrb[0].mxu0 %v976
      %v1265 = vpop.f32.mrb[0].mxu0
      %v1266 = vadd.f32 0.0, %v1265
      %v1267 = vpop.f32.mrb[0].mxu0
      %1268 = vmatprep.mubr.f32.mxu0 0.0
      %1269 = vmatmul.mubr.f32.gmra.mrb[0].mxu0 %v979
      %v1270 = vpop.f32.mrb[0].mxu0
      %v1271 = vadd.f32 0.0, %v1270
      %v1272 = vpop.f32.mrb[0].mxu0
      %1273 = vmatprep.mubr.f32.mxu0 0.0
      %1274 = vmatmul.mubr.f32.gmra.mrb[0].mxu0 %v982
      %v1275 = vpop.f32.mrb[0].mxu0
      %v1276 = vadd.f32 0.0, %v1275
      %v1277 = vpop.f32.mrb[0].mxu0
      %1278 = vmatprep.mubr.f32.mxu0 0.0
      %1279 = vmatmul.mubr.f32.gmra.mrb[0].mxu0 %v985
      %v1280 = vpop.f32.mrb[0].mxu0
      %v1281 = vadd.f32 0.0, %v1280
      %v1282 = vpop.f32.mrb[0].mxu0
      %1283 = vmatprep.mubr.f32.mxu0 0.0
      %1284 = vmatmul.mubr.f32.gmra.mrb[0].mxu0 %v988
      %v1285 = vpop.f32.mrb[0].mxu0
      %v1286 = vadd.f32 0.0, %v1285
      %v1287 = vpop.f32.mrb[0].mxu0
      %1288 = vmatprep.mubr.f32.mxu0 0.0
      %1289 = vmatmul.mubr.f32.gmra.mrb[0].mxu0 %v991
      %v1290 = vpop.f32.mrb[0].mxu0
      %v1291 = vadd.f32 0.0, %v1290
      %v1292 = vpop.f32.mrb[0].mxu0
      %1293 = vmatprep.mubr.f32.mxu0 0.0
      %1294 = vmatmul.mubr.f32.gmra.mrb[0].mxu0 %v994
      %v1295 = vpop.f32.mrb[0].mxu0
      %v1296 = vadd.f32 0.0, %v1295
      %v1297 = vpop.f32.mrb[0].mxu0
      %1298 = vmatprep.mubr.f32.mxu0 0.0
      %1299 = vmatmul.mubr.f32.gmra.mrb[0].mxu0 %v997
      %v1300 = vpop.f32.mrb[0].mxu0
      %v1301 = vadd.f32 0.0, %v1300
      %v1302 = vpop.f32.mrb[0].mxu0
      %1303 = vmatprep.mubr.f32.mxu0 0.0
      %1304 = vmatmul.mubr.f32.gmra.mrb[0].mxu0 %v1000
      %v1305 = vpop.f32.mrb[0].mxu0
      %v1306 = vadd.f32 0.0, %v1305
      %v1307 = vpop.f32.mrb[0].mxu0
      %1308 = vmatprep.mubr.f32.mxu0 0.0
      %1309 = vmatmul.mubr.f32.gmra.mrb[0].mxu0 %v1003
      %v1310 = vpop.f32.mrb[0].mxu0
      %v1311 = vadd.f32 0.0, %v1310
      %v1312 = vpop.f32.mrb[0].mxu0
      %1313 = vmatprep.mubr.f32.mxu0 0.0
      %1314 = vmatmul.mubr.f32.gmra.mrb[0].mxu0 %v1006
      %v1315 = vpop.f32.mrb[0].mxu0
      %v1316 = vadd.f32 0.0, %v1315
      %v1317 = vpop.f32.mrb[0].mxu0
      %1318 = vmatprep.mubr.f32.mxu0 0.0
      %1319 = vmatmul.mubr.f32.gmra.mrb[0].mxu0 %v1009
      %v1320 = vpop.f32.mrb[0].mxu0
      %v1321 = vadd.f32 0.0, %v1320
      %v1322 = vpop.f32.mrb[0].mxu0
      %1323 = vmatprep.mubr.f32.mxu0 0.0
      %1324 = vmatmul.mubr.f32.gmra.mrb[0].mxu0 %v1012
      %v1325 = vpop.f32.mrb[0].mxu0
      %v1326 = vadd.f32 0.0, %v1325
      %v1327 = vpop.f32.mrb[0].mxu0
      %1328 = vmatprep.mubr.f32.mxu0 0.0
      %1329 = vmatmul.mubr.f32.gmra.mrb[0].mxu0 %v1015
      %v1330 = vpop.f32.mrb[0].mxu0
      %v1331 = vadd.f32 0.0, %v1330
      %v1332 = vpop.f32.mrb[0].mxu0
      %1333 = vmatprep.mubr.f32.mxu0 0.0
      %1334 = vmatmul.mubr.f32.gmra.mrb[0].mxu0 %v1018
      %v1335 = vpop.f32.mrb[0].mxu0
      %v1336 = vadd.f32 0.0, %v1335
      %v1337 = vpop.f32.mrb[0].mxu0
      %1338 = vmatprep.mubr.f32.mxu0 0.0
      %1339 = vmatmul.mubr.f32.gmra.mrb[0].mxu0 %v1021
      %v1340 = vpop.f32.mrb[0].mxu0
      %v1341 = vadd.f32 0.0, %v1340
      %v1342 = vpop.f32.mrb[0].mxu0
      %1343 = vmatprep.mubr.f32.mxu0 0.0
      %1344 = vmatmul.mubr.f32.gmra.mrb[0].mxu0 %v1024
      %v1345 = vpop.f32.mrb[0].mxu0
      %v1346 = vadd.f32 0.0, %v1345
      %v1347 = vpop.f32.mrb[0].mxu0
      %1348 = vmatprep.mubr.f32.mxu0 0.0
      %1349 = vmatmul.mubr.f32.gmra.mrb[0].mxu0 %v1027
      %v1350 = vpop.f32.mrb[0].mxu0
      %v1351 = vadd.f32 0.0, %v1350
      %v1352 = vpop.f32.mrb[0].mxu0
      %1353 = vmatprep.mubr.f32.mxu0 0.0
      %1354 = vmatmul.mubr.f32.gmra.mrb[0].mxu0 %v1030
      %v1355 = vpop.f32.mrb[0].mxu0
      %v1356 = vadd.f32 0.0, %v1355
      %v1357 = vpop.f32.mrb[0].mxu0
      %1358 = vmatprep.mubr.f32.mxu0 0.0
      %1359 = vmatmul.mubr.f32.gmra.mrb[0].mxu0 %v1033
      %v1360 = vpop.f32.mrb[0].mxu0
      %v1361 = vadd.f32 0.0, %v1360
      %v1362 = vpop.f32.mrb[0].mxu0
      %1363 = vmatprep.mubr.f32.mxu0 0.0
      %1364 = vmatmul.mubr.f32.gmra.mrb[0].mxu0 %v1036
      %v1365 = vpop.f32.mrb[0].mxu0
      %v1366 = vadd.f32 0.0, %v1365
      %v1367 = vpop.f32.mrb[0].mxu0
      %1368 = vmatprep.mubr.f32.mxu0 0.0
      %1369 = vmatmul.mubr.f32.gmra.mrb[0].mxu0 %v1039
      %v1370 = vpop.f32.mrb[0].mxu0
      %v1371 = vadd.f32 0.0, %v1370
      %v1372 = vpop.f32.mrb[0].mxu0
      %1373 = vmatprep.mubr.f32.mxu0 0.0
      %1374 = vmatmul.mubr.f32.gmra.mrb[0].mxu0 %v1042
      %v1375 = vpop.f32.mrb[0].mxu0
      %v1376 = vadd.f32 0.0, %v1375
      %v1377 = vpop.f32.mrb[0].mxu0
      %1378 = vmatprep.mubr.f32.mxu0 0.0
      %1379 = vmatmul.mubr.f32.gmra.mrb[0].mxu0 %v1045
      %v1380 = vpop.f32.mrb[0].mxu0
      %v1381 = vadd.f32 0.0, %v1380
      %v1382 = vpop.f32.mrb[0].mxu0
      %1383 = vmatprep.mubr.f32.mxu0 0.0
      %1384 = vmatmul.mubr.f32.gmra.mrb[0].mxu0 %v1048
      %v1385 = vpop.f32.mrb[0].mxu0
      %v1386 = vadd.f32 0.0, %v1385
      %v1387 = vpop.f32.mrb[0].mxu0
      %1388 = vmatprep.mubr.f32.mxu0 0.0
      %1389 = vmatmul.mubr.f32.gmra.mrb[0].mxu0 %v1051
      %v1390 = vpop.f32.mrb[0].mxu0
      %v1391 = vadd.f32 0.0, %v1390
      %v1392 = vpop.f32.mrb[0].mxu0
      %1393 = vmatprep.mubr.f32.mxu0 0.0
      %1394 = vmatmul.mubr.f32.gmra.mrb[0].mxu0 %v1054
      %v1395 = vpop.f32.mrb[0].mxu0
      %v1396 = vadd.f32 0.0, %v1395
      %v1397 = vpop.f32.mrb[0].mxu0
      %1398 = vmatprep.mubr.f32.mxu0 0.0
      %1399 = vmatmul.mubr.f32.gmra.mrb[0].mxu0 %v1057
      %v1400 = vpop.f32.mrb[0].mxu0
      %v1401 = vadd.f32 0.0, %v1400
      %v1402 = vpop.f32.mrb[0].mxu0
      %1403 = vmatprep.mubr.f32.mxu0 0.0
      %1404 = vmatmul.mubr.f32.gmra.mrb[0].mxu0 %v1060
      %v1405 = vpop.f32.mrb[0].mxu0
      %v1406 = vadd.f32 0.0, %v1405
      %v1407 = vpop.f32.mrb[0].mxu0
      %1408 = vmatprep.mubr.f32.mxu0 0.0
      %1409 = vmatmul.mubr.f32.gmra.mrb[0].mxu0 %v1063
      %v1410 = vpop.f32.mrb[0].mxu0
      %v1411 = vadd.f32 0.0, %v1410
      %v1412 = vpop.f32.mrb[0].mxu0
      %1413 = vmatprep.mubr.f32.mxu0 0.0
      %1414 = vmatmul.mubr.f32.gmra.mrb[0].mxu0 %v1066
      %v1415 = vpop.f32.mrb[0].mxu0
      %v1416 = vadd.f32 0.0, %v1415
      %v1417 = vpop.f32.mrb[0].mxu0
      %1418 = vmatprep.mubr.f32.mxu0 0.0
      %1419 = vmatmul.mubr.f32.gmra.mrb[0].mxu0 %v1069
      %v1420 = vpop.f32.mrb[0].mxu0
      %v1421 = vadd.f32 0.0, %v1420
      %v1422 = vpop.f32.mrb[0].mxu0
      %1423 = vmatprep.mubr.f32.mxu0 0.0
      %1424 = vmatmul.mubr.f32.gmra.mrb[0].mxu0 %v1072
      %v1425 = vpop.f32.mrb[0].mxu0
      %v1426 = vadd.f32 0.0, %v1425
      %v1427 = vpop.f32.mrb[0].mxu0
      %1428 = vmatprep.mubr.f32.mxu0 0.0
      %1429 = vmatmul.mubr.f32.gmra.mrb[0].mxu0 %v1075
      %v1430 = vpop.f32.mrb[0].mxu0
      %v1431 = vadd.f32 0.0, %v1430
      %v1432 = vpop.f32.mrb[0].mxu0
      %1433 = vmatprep.mubr.f32.mxu0 0.0
      %1434 = vmatmul.mubr.f32.gmra.mrb[0].mxu0 %v1078
      %v1435 = vpop.f32.mrb[0].mxu0
      %v1436 = vadd.f32 0.0, %v1435
      %v1437 = vpop.f32.mrb[0].mxu0
      %1438 = vmatprep.mubr.f32.mxu0 0.0
      %1439 = vmatmul.mubr.f32.gmra.mrb[0].mxu0 %v1081
      %v1440 = vpop.f32.mrb[0].mxu0
      %v1441 = vadd.f32 0.0, %v1440
      %v1442 = vpop.f32.mrb[0].mxu0
      %1443 = vmatprep.mubr.f32.mxu0 0.0
      %1444 = vmatmul.mubr.f32.gmra.mrb[0].mxu0 %v1084
      %v1445 = vpop.f32.mrb[0].mxu0
      %v1446 = vadd.f32 0.0, %v1445
      %v1447 = vpop.f32.mrb[0].mxu0
      %1448 = vmatprep.mubr.f32.mxu0 0.0
      %1449 = vmatmul.mubr.f32.gmra.mrb[0].mxu0 %v1087
      %v1450 = vpop.f32.mrb[0].mxu0
      %v1451 = vadd.f32 0.0, %v1450
      %v1452 = vpop.f32.mrb[0].mxu0
      %1453 = vmatprep.mubr.f32.mxu0 0.0
      %1454 = vmatmul.mubr.f32.gmra.mrb[0].mxu0 %v1090
      %v1455 = vpop.f32.mrb[0].mxu0
      %v1456 = vadd.f32 0.0, %v1455
      %v1457 = vpop.f32.mrb[0].mxu0
      %1458 = vmatprep.mubr.f32.mxu0 0.0
      %1459 = vmatmul.mubr.f32.gmra.mrb[0].mxu0 %v1093
      %v1460 = vpop.f32.mrb[0].mxu0
      %v1461 = vadd.f32 0.0, %v1460
      %v1462 = vpop.f32.mrb[0].mxu0
      %1463 = vmatprep.mubr.f32.mxu0 0.0
      %1464 = vmatmul.mubr.f32.gmra.mrb[0].mxu0 %v1096
      %v1465 = vpop.f32.mrb[0].mxu0
      %v1466 = vadd.f32 0.0, %v1465
      %v1467 = vpop.f32.mrb[0].mxu0
      %1468 = vmatprep.mubr.f32.mxu0 0.0
      %1469 = vmatmul.mubr.f32.gmra.mrb[0].mxu0 %v1099
      %v1470 = vpop.f32.mrb[0].mxu0
      %v1471 = vadd.f32 0.0, %v1470
      %v1472 = vpop.f32.mrb[0].mxu0
      %1473 = vmatprep.mubr.f32.mxu0 0.0
      %1474 = vmatmul.mubr.f32.gmra.mrb[0].mxu0 %v1102
      %v1475 = vpop.f32.mrb[0].mxu0
      %v1476 = vadd.f32 0.0, %v1475
      %v1477 = vpop.f32.mrb[0].mxu0
      %1478 = vmatprep.mubr.f32.mxu0 0.0
      %1479 = vmatmul.mubr.f32.gmra.mrb[0].mxu0 %v1105
      %v1480 = vpop.f32.mrb[0].mxu0
      %v1481 = vadd.f32 0.0, %v1480
      %v1482 = vpop.f32.mrb[0].mxu0
      %1483 = vmatprep.mubr.f32.mxu0 0.0
      %1484 = vmatmul.mubr.f32.gmra.mrb[0].mxu0 %v1108
      %v1485 = vpop.f32.mrb[0].mxu0
      %v1486 = vadd.f32 0.0, %v1485
      %v1487 = vpop.f32.mrb[0].mxu0
      %1488 = vmatprep.mubr.f32.mxu0 0.0
      %1489 = vmatmul.mubr.f32.gmra.mrb[0].mxu0 %v1111
      %v1490 = vpop.f32.mrb[0].mxu0
      %v1491 = vadd.f32 0.0, %v1490
      %v1492 = vpop.f32.mrb[0].mxu0
      %1493 = vmatprep.mubr.f32.mxu0 0.0
      %1494 = vmatmul.mubr.f32.gmra.mrb[0].mxu0 %v1114
      %v1495 = vpop.f32.mrb[0].mxu0
      %v1496 = vadd.f32 0.0, %v1495
      %v1497 = vpop.f32.mrb[0].mxu0
      %1498 = vmatprep.mubr.f32.mxu0 0.0
      %1499 = vmatmul.mubr.f32.gmra.mrb[0].mxu0 %v1117
      %v1500 = vpop.f32.mrb[0].mxu0
      %v1501 = vadd.f32 0.0, %v1500
      %v1502 = vpop.f32.mrb[0].mxu0
      %1503 = vdwg.mxu0
      %v1504 = vmax.f32 %v1186, 0.0
      %v1505 = vmax.f32 %v1191, 0.0
      %v1506 = vmax.f32 %v1196, 0.0
      %v1507 = vmax.f32 %v1201, 0.0
      %v1508 = vmax.f32 %v1206, 0.0
      %v1509 = vmax.f32 %v1211, 0.0
      %v1510 = vmax.f32 %v1216, 0.0
      %v1511 = vmax.f32 %v1221, 0.0
      %v1512 = vmax.f32 %v1226, 0.0
      %v1513 = vmax.f32 %v1231, 0.0
      %v1514 = vmax.f32 %v1236, 0.0
      %v1515 = vmax.f32 %v1241, 0.0
      %v1516 = vmax.f32 %v1246, 0.0
      %v1517 = vmax.f32 %v1251, 0.0
      %v1518 = vmax.f32 %v1256, 0.0
      %v1519 = vmax.f32 %v1261, 0.0
      %v1520 = vmax.f32 %v1266, 0.0
      %v1521 = vmax.f32 %v1271, 0.0
      %v1522 = vmax.f32 %v1276, 0.0
      %v1523 = vmax.f32 %v1281, 0.0
      %v1524 = vmax.f32 %v1286, 0.0
      %v1525 = vmax.f32 %v1291, 0.0
      %v1526 = vmax.f32 %v1296, 0.0
      %v1527 = vmax.f32 %v1301, 0.0
      %v1528 = vmax.f32 %v1306, 0.0
      %v1529 = vmax.f32 %v1311, 0.0
      %v1530 = vmax.f32 %v1316, 0.0
      %v1531 = vmax.f32 %v1321, 0.0
      %v1532 = vmax.f32 %v1326, 0.0
      %v1533 = vmax.f32 %v1331, 0.0
      %v1534 = vmax.f32 %v1336, 0.0
      %v1535 = vmax.f32 %v1341, 0.0
      %v1536 = vmax.f32 %v1346, 0.0
      %v1537 = vmax.f32 %v1351, 0.0
      %v1538 = vmax.f32 %v1356, 0.0
      %v1539 = vmax.f32 %v1361, 0.0
      %v1540 = vmax.f32 %v1366, 0.0
      %v1541 = vmax.f32 %v1371, 0.0
      %v1542 = vmax.f32 %v1376, 0.0
      %v1543 = vmax.f32 %v1381, 0.0
      %v1544 = vmax.f32 %v1386, 0.0
      %v1545 = vmax.f32 %v1391, 0.0
      %v1546 = vmax.f32 %v1396, 0.0
      %v1547 = vmax.f32 %v1401, 0.0
      %v1548 = vmax.f32 %v1406, 0.0
      %v1549 = vmax.f32 %v1411, 0.0
      %v1550 = vmax.f32 %v1416, 0.0
      %v1551 = vmax.f32 %v1421, 0.0
      %v1552 = vmax.f32 %v1426, 0.0
      %v1553 = vmax.f32 %v1431, 0.0
      %v1554 = vmax.f32 %v1436, 0.0
      %v1555 = vmax.f32 %v1441, 0.0
      %v1556 = vmax.f32 %v1446, 0.0
      %v1557 = vmax.f32 %v1451, 0.0
      %v1558 = vmax.f32 %v1456, 0.0
      %v1559 = vmax.f32 %v1461, 0.0
      %v1560 = vmax.f32 %v1466, 0.0
      %v1561 = vmax.f32 %v1471, 0.0
      %v1562 = vmax.f32 %v1476, 0.0
      %v1563 = vmax.f32 %v1481, 0.0
      %v1564 = vmax.f32 %v1486, 0.0
      %v1565 = vmax.f32 %v1491, 0.0
      %v1566 = vmax.f32 %v1496, 0.0
      %v1567 = vmax.f32 %v1501, 0.0
      %v1568 = vld [vmem:[%s3] sm:$0xff]
      %v1569 = vld [vmem:[%s3 + $0x8] sm:$0xff]
      %v1570 = vld [vmem:[%s3 + $0x10] sm:$0xff]
      %v1571 = vld [vmem:[%s3 + $0x18] sm:$0xff]
      %v1572 = vld [vmem:[%s3 + $0x20] sm:$0xff]
      %v1573 = vld [vmem:[%s3 + $0x28] sm:$0xff]
      %v1574 = vld [vmem:[%s3 + $0x30] sm:$0xff]
      %v1575 = vld [vmem:[%s3 + $0x38] sm:$0xff]
      %v1577 = vsel %vm926, %v1504, 0
      %v1580 = vsel %vm926, %v1505, 0
      %v1583 = vsel %vm926, %v1506, 0
      %v1586 = vsel %vm926, %v1507, 0
      %v1589 = vsel %vm926, %v1508, 0
      %v1592 = vsel %vm926, %v1509, 0
      %v1595 = vsel %vm926, %v1510, 0
      %v1598 = vsel %vm926, %v1511, 0
      %v1601 = vsel %vm926, %v1512, 0
      %v1604 = vsel %vm926, %v1513, 0
      %v1607 = vsel %vm926, %v1514, 0
      %v1610 = vsel %vm926, %v1515, 0
      %v1613 = vsel %vm926, %v1516, 0
      %v1616 = vsel %vm926, %v1517, 0
      %v1619 = vsel %vm926, %v1518, 0
      %v1622 = vsel %vm926, %v1519, 0
      %v1625 = vsel %vm926, %v1520, 0
      %v1628 = vsel %vm926, %v1521, 0
      %v1631 = vsel %vm926, %v1522, 0
      %v1634 = vsel %vm926, %v1523, 0
      %v1637 = vsel %vm926, %v1524, 0
      %v1640 = vsel %vm926, %v1525, 0
      %v1643 = vsel %vm926, %v1526, 0
      %v1646 = vsel %vm926, %v1527, 0
      %v1649 = vsel %vm926, %v1528, 0
      %v1652 = vsel %vm926, %v1529, 0
      %v1655 = vsel %vm926, %v1530, 0
      %v1658 = vsel %vm926, %v1531, 0
      %v1661 = vsel %vm926, %v1532, 0
      %v1664 = vsel %vm926, %v1533, 0
      %v1667 = vsel %vm926, %v1534, 0
      %v1670 = vsel %vm926, %v1535, 0
      %v1673 = vsel %vm926, %v1536, 0
      %v1676 = vsel %vm926, %v1537, 0
      %v1679 = vsel %vm926, %v1538, 0
      %v1682 = vsel %vm926, %v1539, 0
      %v1685 = vsel %vm926, %v1540, 0
      %v1688 = vsel %vm926, %v1541, 0
      %v1691 = vsel %vm926, %v1542, 0
      %v1694 = vsel %vm926, %v1543, 0
      %v1697 = vsel %vm926, %v1544, 0
      %v1700 = vsel %vm926, %v1545, 0
      %v1703 = vsel %vm926, %v1546, 0
      %v1706 = vsel %vm926, %v1547, 0
      %v1709 = vsel %vm926, %v1548, 0
      %v1712 = vsel %vm926, %v1549, 0
      %v1715 = vsel %vm926, %v1550, 0
      %v1718 = vsel %vm926, %v1551, 0
      %v1721 = vsel %vm926, %v1552, 0
      %v1724 = vsel %vm926, %v1553, 0
      %v1727 = vsel %vm926, %v1554, 0
      %v1730 = vsel %vm926, %v1555, 0
      %v1733 = vsel %vm926, %v1556, 0
      %v1736 = vsel %vm926, %v1557, 0
      %v1739 = vsel %vm926, %v1558, 0
      %v1742 = vsel %vm926, %v1559, 0
      %v1745 = vsel %vm926, %v1560, 0
      %v1748 = vsel %vm926, %v1561, 0
      %v1751 = vsel %vm926, %v1562, 0
      %v1754 = vsel %vm926, %v1563, 0
      %v1757 = vsel %vm926, %v1564, 0
      %v1760 = vsel %vm926, %v1565, 0
      %v1763 = vsel %vm926, %v1566, 0
      %v1766 = vsel %vm926, %v1567, 0
      %1768 = vmatprep.subr.mxu0 0.0
      %1769 = vmatpush1.msra.mxu0 %v1568
      %1770 = vmatprep.subr.mxu0 0.0
      %1771 = vmatpush1.msra.mxu0 %v1569
      %1772 = vmatprep.subr.mxu0 0.0
      %1773 = vmatpush1.msra.mxu0 %v1570
      %1774 = vmatprep.subr.mxu0 0.0
      %1775 = vmatpush1.msra.mxu0 %v1571
      %1776 = vmatprep.subr.mxu0 0.0
      %1777 = vmatpush1.msra.mxu0 %v1572
      %1778 = vmatprep.subr.mxu0 0.0
      %1779 = vmatpush1.msra.mxu0 %v1573
      %1780 = vmatprep.subr.mxu0 0.0
      %1781 = vmatpush1.msra.mxu0 %v1574
      %1782 = vmatprep.subr.mxu0 0.0
      %1783 = vmatpush1.msra.mxu0 %v1575
      %1784 = vmatprep.subr.mxu0 0.0
      %1785 = vmatpush1.msra.mxu0 0.0
      %1786 = vmatprep.subr.mxu0 0.0
      %1787 = vmatpush1.msra.mxu0 0.0
      %1788 = vmatprep.subr.mxu0 0.0
      %1789 = vmatpush1.msra.mxu0 0.0
      %1790 = vmatprep.subr.mxu0 0.0
      %1791 = vmatpush1.msra.mxu0 0.0
      %1792 = vmatprep.subr.mxu0 0.0
      %1793 = vmatpush1.msra.mxu0 0.0
      %1794 = vmatprep.subr.mxu0 0.0
      %1795 = vmatpush1.msra.mxu0 0.0
      %1796 = vmatprep.subr.mxu0 0.0
      %1797 = vmatpush1.msra.mxu0 0.0
      %1798 = vmatprep.subr.mxu0 0.0
      %1799 = vmatpush1.msra.mxu0 0.0
      %1800 = vmatprep.subr.mxu0 0.0
      %1801 = vmatpush1.msra.mxu0 0.0
      %1802 = vmatprep.subr.mxu0 0.0
      %1803 = vmatpush1.msra.mxu0 0.0
      %1804 = vmatprep.subr.mxu0 0.0
      %1805 = vmatpush1.msra.mxu0 0.0
      %1806 = vmatprep.subr.mxu0 0.0
      %1807 = vmatpush1.msra.mxu0 0.0
      %1808 = vmatprep.subr.mxu0 0.0
      %1809 = vmatpush1.msra.mxu0 0.0
      %1810 = vmatprep.subr.mxu0 0.0
      %1811 = vmatpush1.msra.mxu0 0.0
      %1812 = vmatprep.subr.mxu0 0.0
      %1813 = vmatpush1.msra.mxu0 0.0
      %1814 = vmatprep.subr.mxu0 0.0
      %1815 = vmatpush1.msra.mxu0 0.0
      %1816 = vmatprep.subr.mxu0 0.0
      %1817 = vmatpush1.msra.mxu0 0.0
      %1818 = vmatprep.subr.mxu0 0.0
      %1819 = vmatpush1.msra.mxu0 0.0
      %1820 = vmatprep.subr.mxu0 0.0
      %1821 = vmatpush1.msra.mxu0 0.0
      %1822 = vmatprep.subr.mxu0 0.0
      %1823 = vmatpush1.msra.mxu0 0.0
      %1824 = vmatprep.subr.mxu0 0.0
      %1825 = vmatpush1.msra.mxu0 0.0
      %1826 = vmatprep.subr.mxu0 0.0
      %1827 = vmatpush1.msra.mxu0 0.0
      %1828 = vmatprep.subr.mxu0 0.0
      %1829 = vmatpush1.msra.mxu0 0.0
      %1830 = vmatprep.subr.mxu0 0.0
      %1831 = vmatpush1.msra.mxu0 0.0
      %1832 = vmatprep.mubr.f32.mxu0 0.0
      %1833 = vmatmul.mubr.f32.gmra.mrb[0].mxu0 %v1577
      %v1834 = vpop.f32.mrb[0].mxu0
      %v1835 = vadd.f32 0.0, %v1834
      %v1836 = vpop.f32.mrb[0].mxu0
      %1837 = vmatprep.mubr.f32.mxu0 0.0
      %1838 = vmatmul.mubr.f32.gmra.mrb[0].mxu0 %v1580
      %v1839 = vpop.f32.mrb[0].mxu0
      %v1840 = vadd.f32 0.0, %v1839
      %v1841 = vpop.f32.mrb[0].mxu0
      %1842 = vmatprep.mubr.f32.mxu0 0.0
      %1843 = vmatmul.mubr.f32.gmra.mrb[0].mxu0 %v1583
      %v1844 = vpop.f32.mrb[0].mxu0
      %v1845 = vadd.f32 0.0, %v1844
      %v1846 = vpop.f32.mrb[0].mxu0
      %1847 = vmatprep.mubr.f32.mxu0 0.0
      %1848 = vmatmul.mubr.f32.gmra.mrb[0].mxu0 %v1586
      %v1849 = vpop.f32.mrb[0].mxu0
      %v1850 = vadd.f32 0.0, %v1849
      %v1851 = vpop.f32.mrb[0].mxu0
      %1852 = vmatprep.mubr.f32.mxu0 0.0
      %1853 = vmatmul.mubr.f32.gmra.mrb[0].mxu0 %v1589
      %v1854 = vpop.f32.mrb[0].mxu0
      %v1855 = vadd.f32 0.0, %v1854
      %v1856 = vpop.f32.mrb[0].mxu0
      %1857 = vmatprep.mubr.f32.mxu0 0.0
      %1858 = vmatmul.mubr.f32.gmra.mrb[0].mxu0 %v1592
      %v1859 = vpop.f32.mrb[0].mxu0
      %v1860 = vadd.f32 0.0, %v1859
      %v1861 = vpop.f32.mrb[0].mxu0
      %1862 = vmatprep.mubr.f32.mxu0 0.0
      %1863 = vmatmul.mubr.f32.gmra.mrb[0].mxu0 %v1595
      %v1864 = vpop.f32.mrb[0].mxu0
      %v1865 = vadd.f32 0.0, %v1864
      %v1866 = vpop.f32.mrb[0].mxu0
      %1867 = vmatprep.mubr.f32.mxu0 0.0
      %1868 = vmatmul.mubr.f32.gmra.mrb[0].mxu0 %v1598
      %v1869 = vpop.f32.mrb[0].mxu0
      %v1870 = vadd.f32 0.0, %v1869
      %v1871 = vpop.f32.mrb[0].mxu0
      %1872 = vmatprep.mubr.f32.mxu0 0.0
      %1873 = vmatmul.mubr.f32.gmra.mrb[0].mxu0 %v1601
      %v1874 = vpop.f32.mrb[0].mxu0
      %v1875 = vadd.f32 0.0, %v1874
      %v1876 = vpop.f32.mrb[0].mxu0
      %1877 = vmatprep.mubr.f32.mxu0 0.0
      %1878 = vmatmul.mubr.f32.gmra.mrb[0].mxu0 %v1604
      %v1879 = vpop.f32.mrb[0].mxu0
      %v1880 = vadd.f32 0.0, %v1879
      %v1881 = vpop.f32.mrb[0].mxu0
      %1882 = vmatprep.mubr.f32.mxu0 0.0
      %1883 = vmatmul.mubr.f32.gmra.mrb[0].mxu0 %v1607
      %v1884 = vpop.f32.mrb[0].mxu0
      %v1885 = vadd.f32 0.0, %v1884
      %v1886 = vpop.f32.mrb[0].mxu0
      %1887 = vmatprep.mubr.f32.mxu0 0.0
      %1888 = vmatmul.mubr.f32.gmra.mrb[0].mxu0 %v1610
      %v1889 = vpop.f32.mrb[0].mxu0
      %v1890 = vadd.f32 0.0, %v1889
      %v1891 = vpop.f32.mrb[0].mxu0
      %1892 = vmatprep.mubr.f32.mxu0 0.0
      %1893 = vmatmul.mubr.f32.gmra.mrb[0].mxu0 %v1613
      %v1894 = vpop.f32.mrb[0].mxu0
      %v1895 = vadd.f32 0.0, %v1894
      %v1896 = vpop.f32.mrb[0].mxu0
      %1897 = vmatprep.mubr.f32.mxu0 0.0
      %1898 = vmatmul.mubr.f32.gmra.mrb[0].mxu0 %v1616
      %v1899 = vpop.f32.mrb[0].mxu0
      %v1900 = vadd.f32 0.0, %v1899
      %v1901 = vpop.f32.mrb[0].mxu0
      %1902 = vmatprep.mubr.f32.mxu0 0.0
      %1903 = vmatmul.mubr.f32.gmra.mrb[0].mxu0 %v1619
      %v1904 = vpop.f32.mrb[0].mxu0
      %v1905 = vadd.f32 0.0, %v1904
      %v1906 = vpop.f32.mrb[0].mxu0
      %1907 = vmatprep.mubr.f32.mxu0 0.0
      %1908 = vmatmul.mubr.f32.gmra.mrb[0].mxu0 %v1622
      %v1909 = vpop.f32.mrb[0].mxu0
      %v1910 = vadd.f32 0.0, %v1909
      %v1911 = vpop.f32.mrb[0].mxu0
      %1912 = vmatprep.mubr.f32.mxu0 0.0
      %1913 = vmatmul.mubr.f32.gmra.mrb[0].mxu0 %v1625
      %v1914 = vpop.f32.mrb[0].mxu0
      %v1915 = vadd.f32 0.0, %v1914
      %v1916 = vpop.f32.mrb[0].mxu0
      %1917 = vmatprep.mubr.f32.mxu0 0.0
      %1918 = vmatmul.mubr.f32.gmra.mrb[0].mxu0 %v1628
      %v1919 = vpop.f32.mrb[0].mxu0
      %v1920 = vadd.f32 0.0, %v1919
      %v1921 = vpop.f32.mrb[0].mxu0
      %1922 = vmatprep.mubr.f32.mxu0 0.0
      %1923 = vmatmul.mubr.f32.gmra.mrb[0].mxu0 %v1631
      %v1924 = vpop.f32.mrb[0].mxu0
      %v1925 = vadd.f32 0.0, %v1924
      %v1926 = vpop.f32.mrb[0].mxu0
      %1927 = vmatprep.mubr.f32.mxu0 0.0
      %1928 = vmatmul.mubr.f32.gmra.mrb[0].mxu0 %v1634
      %v1929 = vpop.f32.mrb[0].mxu0
      %v1930 = vadd.f32 0.0, %v1929
      %v1931 = vpop.f32.mrb[0].mxu0
      %1932 = vmatprep.mubr.f32.mxu0 0.0
      %1933 = vmatmul.mubr.f32.gmra.mrb[0].mxu0 %v1637
      %v1934 = vpop.f32.mrb[0].mxu0
      %v1935 = vadd.f32 0.0, %v1934
      %v1936 = vpop.f32.mrb[0].mxu0
      %1937 = vmatprep.mubr.f32.mxu0 0.0
      %1938 = vmatmul.mubr.f32.gmra.mrb[0].mxu0 %v1640
      %v1939 = vpop.f32.mrb[0].mxu0
      %v1940 = vadd.f32 0.0, %v1939
      %v1941 = vpop.f32.mrb[0].mxu0
      %1942 = vmatprep.mubr.f32.mxu0 0.0
      %1943 = vmatmul.mubr.f32.gmra.mrb[0].mxu0 %v1643
      %v1944 = vpop.f32.mrb[0].mxu0
      %v1945 = vadd.f32 0.0, %v1944
      %v1946 = vpop.f32.mrb[0].mxu0
      %1947 = vmatprep.mubr.f32.mxu0 0.0
      %1948 = vmatmul.mubr.f32.gmra.mrb[0].mxu0 %v1646
      %v1949 = vpop.f32.mrb[0].mxu0
      %v1950 = vadd.f32 0.0, %v1949
      %v1951 = vpop.f32.mrb[0].mxu0
      %1952 = vmatprep.mubr.f32.mxu0 0.0
      %1953 = vmatmul.mubr.f32.gmra.mrb[0].mxu0 %v1649
      %v1954 = vpop.f32.mrb[0].mxu0
      %v1955 = vadd.f32 0.0, %v1954
      %v1956 = vpop.f32.mrb[0].mxu0
      %1957 = vmatprep.mubr.f32.mxu0 0.0
      %1958 = vmatmul.mubr.f32.gmra.mrb[0].mxu0 %v1652
      %v1959 = vpop.f32.mrb[0].mxu0
      %v1960 = vadd.f32 0.0, %v1959
      %v1961 = vpop.f32.mrb[0].mxu0
      %1962 = vmatprep.mubr.f32.mxu0 0.0
      %1963 = vmatmul.mubr.f32.gmra.mrb[0].mxu0 %v1655
      %v1964 = vpop.f32.mrb[0].mxu0
      %v1965 = vadd.f32 0.0, %v1964
      %v1966 = vpop.f32.mrb[0].mxu0
      %1967 = vmatprep.mubr.f32.mxu0 0.0
      %1968 = vmatmul.mubr.f32.gmra.mrb[0].mxu0 %v1658
      %v1969 = vpop.f32.mrb[0].mxu0
      %v1970 = vadd.f32 0.0, %v1969
      %v1971 = vpop.f32.mrb[0].mxu0
      %1972 = vmatprep.mubr.f32.mxu0 0.0
      %1973 = vmatmul.mubr.f32.gmra.mrb[0].mxu0 %v1661
      %v1974 = vpop.f32.mrb[0].mxu0
      %v1975 = vadd.f32 0.0, %v1974
      %v1976 = vpop.f32.mrb[0].mxu0
      %1977 = vmatprep.mubr.f32.mxu0 0.0
      %1978 = vmatmul.mubr.f32.gmra.mrb[0].mxu0 %v1664
      %v1979 = vpop.f32.mrb[0].mxu0
      %v1980 = vadd.f32 0.0, %v1979
      %v1981 = vpop.f32.mrb[0].mxu0
      %1982 = vmatprep.mubr.f32.mxu0 0.0
      %1983 = vmatmul.mubr.f32.gmra.mrb[0].mxu0 %v1667
      %v1984 = vpop.f32.mrb[0].mxu0
      %v1985 = vadd.f32 0.0, %v1984
      %v1986 = vpop.f32.mrb[0].mxu0
      %1987 = vmatprep.mubr.f32.mxu0 0.0
      %1988 = vmatmul.mubr.f32.gmra.mrb[0].mxu0 %v1670
      %v1989 = vpop.f32.mrb[0].mxu0
      %v1990 = vadd.f32 0.0, %v1989
      %v1991 = vpop.f32.mrb[0].mxu0
      %1992 = vmatprep.mubr.f32.mxu0 0.0
      %1993 = vmatmul.mubr.f32.gmra.mrb[0].mxu0 %v1673
      %v1994 = vpop.f32.mrb[0].mxu0
      %v1995 = vadd.f32 0.0, %v1994
      %v1996 = vpop.f32.mrb[0].mxu0
      %1997 = vmatprep.mubr.f32.mxu0 0.0
      %1998 = vmatmul.mubr.f32.gmra.mrb[0].mxu0 %v1676
      %v1999 = vpop.f32.mrb[0].mxu0
      %v2000 = vadd.f32 0.0, %v1999
      %v2001 = vpop.f32.mrb[0].mxu0
      %2002 = vmatprep.mubr.f32.mxu0 0.0
      %2003 = vmatmul.mubr.f32.gmra.mrb[0].mxu0 %v1679
      %v2004 = vpop.f32.mrb[0].mxu0
      %v2005 = vadd.f32 0.0, %v2004
      %v2006 = vpop.f32.mrb[0].mxu0
      %2007 = vmatprep.mubr.f32.mxu0 0.0
      %2008 = vmatmul.mubr.f32.gmra.mrb[0].mxu0 %v1682
      %v2009 = vpop.f32.mrb[0].mxu0
      %v2010 = vadd.f32 0.0, %v2009
      %v2011 = vpop.f32.mrb[0].mxu0
      %2012 = vmatprep.mubr.f32.mxu0 0.0
      %2013 = vmatmul.mubr.f32.gmra.mrb[0].mxu0 %v1685
      %v2014 = vpop.f32.mrb[0].mxu0
      %v2015 = vadd.f32 0.0, %v2014
      %v2016 = vpop.f32.mrb[0].mxu0
      %2017 = vmatprep.mubr.f32.mxu0 0.0
      %2018 = vmatmul.mubr.f32.gmra.mrb[0].mxu0 %v1688
      %v2019 = vpop.f32.mrb[0].mxu0
      %v2020 = vadd.f32 0.0, %v2019
      %v2021 = vpop.f32.mrb[0].mxu0
      %2022 = vmatprep.mubr.f32.mxu0 0.0
      %2023 = vmatmul.mubr.f32.gmra.mrb[0].mxu0 %v1691
      %v2024 = vpop.f32.mrb[0].mxu0
      %v2025 = vadd.f32 0.0, %v2024
      %v2026 = vpop.f32.mrb[0].mxu0
      %2027 = vmatprep.mubr.f32.mxu0 0.0
      %2028 = vmatmul.mubr.f32.gmra.mrb[0].mxu0 %v1694
      %v2029 = vpop.f32.mrb[0].mxu0
      %v2030 = vadd.f32 0.0, %v2029
      %v2031 = vpop.f32.mrb[0].mxu0
      %2032 = vmatprep.mubr.f32.mxu0 0.0
      %2033 = vmatmul.mubr.f32.gmra.mrb[0].mxu0 %v1697
      %v2034 = vpop.f32.mrb[0].mxu0
      %v2035 = vadd.f32 0.0, %v2034
      %v2036 = vpop.f32.mrb[0].mxu0
      %2037 = vmatprep.mubr.f32.mxu0 0.0
      %2038 = vmatmul.mubr.f32.gmra.mrb[0].mxu0 %v1700
      %v2039 = vpop.f32.mrb[0].mxu0
      %v2040 = vadd.f32 0.0, %v2039
      %v2041 = vpop.f32.mrb[0].mxu0
      %2042 = vmatprep.mubr.f32.mxu0 0.0
      %2043 = vmatmul.mubr.f32.gmra.mrb[0].mxu0 %v1703
      %v2044 = vpop.f32.mrb[0].mxu0
      %v2045 = vadd.f32 0.0, %v2044
      %v2046 = vpop.f32.mrb[0].mxu0
      %2047 = vmatprep.mubr.f32.mxu0 0.0
      %2048 = vmatmul.mubr.f32.gmra.mrb[0].mxu0 %v1706
      %v2049 = vpop.f32.mrb[0].mxu0
      %v2050 = vadd.f32 0.0, %v2049
      %v2051 = vpop.f32.mrb[0].mxu0
      %2052 = vmatprep.mubr.f32.mxu0 0.0
      %2053 = vmatmul.mubr.f32.gmra.mrb[0].mxu0 %v1709
      %v2054 = vpop.f32.mrb[0].mxu0
      %v2055 = vadd.f32 0.0, %v2054
      %v2056 = vpop.f32.mrb[0].mxu0
      %2057 = vmatprep.mubr.f32.mxu0 0.0
      %2058 = vmatmul.mubr.f32.gmra.mrb[0].mxu0 %v1712
      %v2059 = vpop.f32.mrb[0].mxu0
      %v2060 = vadd.f32 0.0, %v2059
      %v2061 = vpop.f32.mrb[0].mxu0
      %2062 = vmatprep.mubr.f32.mxu0 0.0
      %2063 = vmatmul.mubr.f32.gmra.mrb[0].mxu0 %v1715
      %v2064 = vpop.f32.mrb[0].mxu0
      %v2065 = vadd.f32 0.0, %v2064
      %v2066 = vpop.f32.mrb[0].mxu0
      %2067 = vmatprep.mubr.f32.mxu0 0.0
      %2068 = vmatmul.mubr.f32.gmra.mrb[0].mxu0 %v1718
      %v2069 = vpop.f32.mrb[0].mxu0
      %v2070 = vadd.f32 0.0, %v2069
      %v2071 = vpop.f32.mrb[0].mxu0
      %2072 = vmatprep.mubr.f32.mxu0 0.0
      %2073 = vmatmul.mubr.f32.gmra.mrb[0].mxu0 %v1721
      %v2074 = vpop.f32.mrb[0].mxu0
      %v2075 = vadd.f32 0.0, %v2074
      %v2076 = vpop.f32.mrb[0].mxu0
      %2077 = vmatprep.mubr.f32.mxu0 0.0
      %2078 = vmatmul.mubr.f32.gmra.mrb[0].mxu0 %v1724
      %v2079 = vpop.f32.mrb[0].mxu0
      %v2080 = vadd.f32 0.0, %v2079
      %v2081 = vpop.f32.mrb[0].mxu0
      %2082 = vmatprep.mubr.f32.mxu0 0.0
      %2083 = vmatmul.mubr.f32.gmra.mrb[0].mxu0 %v1727
      %v2084 = vpop.f32.mrb[0].mxu0
      %v2085 = vadd.f32 0.0, %v2084
      %v2086 = vpop.f32.mrb[0].mxu0
      %2087 = vmatprep.mubr.f32.mxu0 0.0
      %2088 = vmatmul.mubr.f32.gmra.mrb[0].mxu0 %v1730
      %v2089 = vpop.f32.mrb[0].mxu0
      %v2090 = vadd.f32 0.0, %v2089
      %v2091 = vpop.f32.mrb[0].mxu0
      %2092 = vmatprep.mubr.f32.mxu0 0.0
      %2093 = vmatmul.mubr.f32.gmra.mrb[0].mxu0 %v1733
      %v2094 = vpop.f32.mrb[0].mxu0
      %v2095 = vadd.f32 0.0, %v2094
      %v2096 = vpop.f32.mrb[0].mxu0
      %2097 = vmatprep.mubr.f32.mxu0 0.0
      %2098 = vmatmul.mubr.f32.gmra.mrb[0].mxu0 %v1736
      %v2099 = vpop.f32.mrb[0].mxu0
      %v2100 = vadd.f32 0.0, %v2099
      %v2101 = vpop.f32.mrb[0].mxu0
      %2102 = vmatprep.mubr.f32.mxu0 0.0
      %2103 = vmatmul.mubr.f32.gmra.mrb[0].mxu0 %v1739
      %v2104 = vpop.f32.mrb[0].mxu0
      %v2105 = vadd.f32 0.0, %v2104
      %v2106 = vpop.f32.mrb[0].mxu0
      %2107 = vmatprep.mubr.f32.mxu0 0.0
      %2108 = vmatmul.mubr.f32.gmra.mrb[0].mxu0 %v1742
      %v2109 = vpop.f32.mrb[0].mxu0
      %v2110 = vadd.f32 0.0, %v2109
      %v2111 = vpop.f32.mrb[0].mxu0
      %2112 = vmatprep.mubr.f32.mxu0 0.0
      %2113 = vmatmul.mubr.f32.gmra.mrb[0].mxu0 %v1745
      %v2114 = vpop.f32.mrb[0].mxu0
      %v2115 = vadd.f32 0.0, %v2114
      %v2116 = vpop.f32.mrb[0].mxu0
      %2117 = vmatprep.mubr.f32.mxu0 0.0
      %2118 = vmatmul.mubr.f32.gmra.mrb[0].mxu0 %v1748
      %v2119 = vpop.f32.mrb[0].mxu0
      %v2120 = vadd.f32 0.0, %v2119
      %v2121 = vpop.f32.mrb[0].mxu0
      %2122 = vmatprep.mubr.f32.mxu0 0.0
      %2123 = vmatmul.mubr.f32.gmra.mrb[0].mxu0 %v1751
      %v2124 = vpop.f32.mrb[0].mxu0
      %v2125 = vadd.f32 0.0, %v2124
      %v2126 = vpop.f32.mrb[0].mxu0
      %2127 = vmatprep.mubr.f32.mxu0 0.0
      %2128 = vmatmul.mubr.f32.gmra.mrb[0].mxu0 %v1754
      %v2129 = vpop.f32.mrb[0].mxu0
      %v2130 = vadd.f32 0.0, %v2129
      %v2131 = vpop.f32.mrb[0].mxu0
      %2132 = vmatprep.mubr.f32.mxu0 0.0
      %2133 = vmatmul.mubr.f32.gmra.mrb[0].mxu0 %v1757
      %v2134 = vpop.f32.mrb[0].mxu0
      %v2135 = vadd.f32 0.0, %v2134
      %v2136 = vpop.f32.mrb[0].mxu0
      %2137 = vmatprep.mubr.f32.mxu0 0.0
      %2138 = vmatmul.mubr.f32.gmra.mrb[0].mxu0 %v1760
      %v2139 = vpop.f32.mrb[0].mxu0
      %v2140 = vadd.f32 0.0, %v2139
      %v2141 = vpop.f32.mrb[0].mxu0
      %2142 = vmatprep.mubr.f32.mxu0 0.0
      %2143 = vmatmul.mubr.f32.gmra.mrb[0].mxu0 %v1763
      %v2144 = vpop.f32.mrb[0].mxu0
      %v2145 = vadd.f32 0.0, %v2144
      %v2146 = vpop.f32.mrb[0].mxu0
      %2147 = vmatprep.mubr.f32.mxu0 0.0
      %2148 = vmatmul.mubr.f32.gmra.mrb[0].mxu0 %v1766
      %v2149 = vpop.f32.mrb[0].mxu0
      %v2150 = vadd.f32 0.0, %v2149
      %v2151 = vpop.f32.mrb[0].mxu0
      %2152 = vdwg.mxu0
      %vm2153 = vcmask 105472
      %2154 = vst.msk [vmem:[%s199] sm:$0xff] %vm2153, %v1835
      %2155 = vst.msk [vmem:[%s199 + $0x8] sm:$0xff] %vm2153, %v1840
      %2156 = vst.msk [vmem:[%s199 + $0x10] sm:$0xff] %vm2153, %v1845
      %2157 = vst.msk [vmem:[%s199 + $0x18] sm:$0xff] %vm2153, %v1850
      %2158 = vst.msk [vmem:[%s199 + $0x20] sm:$0xff] %vm2153, %v1855
      %2159 = vst.msk [vmem:[%s199 + $0x28] sm:$0xff] %vm2153, %v1860
      %2160 = vst.msk [vmem:[%s199 + $0x30] sm:$0xff] %vm2153, %v1865
      %2161 = vst.msk [vmem:[%s199 + $0x38] sm:$0xff] %vm2153, %v1870
      %2162 = vst.msk [vmem:[%s199 + $0x40] sm:$0xff] %vm2153, %v1875
      %2163 = vst.msk [vmem:[%s199 + $0x48] sm:$0xff] %vm2153, %v1880
      %2164 = vst.msk [vmem:[%s199 + $0x50] sm:$0xff] %vm2153, %v1885
      %2165 = vst.msk [vmem:[%s199 + $0x58] sm:$0xff] %vm2153, %v1890
      %2166 = vst.msk [vmem:[%s199 + $0x60] sm:$0xff] %vm2153, %v1895
      %2167 = vst.msk [vmem:[%s199 + $0x68] sm:$0xff] %vm2153, %v1900
      %2168 = vst.msk [vmem:[%s199 + $0x70] sm:$0xff] %vm2153, %v1905
      %2169 = vst.msk [vmem:[%s199 + $0x78] sm:$0xff] %vm2153, %v1910
      %2170 = vst.msk [vmem:[%s199 + $0x80] sm:$0xff] %vm2153, %v1915
      %2171 = vst.msk [vmem:[%s199 + $0x88] sm:$0xff] %vm2153, %v1920
      %2172 = vst.msk [vmem:[%s199 + $0x90] sm:$0xff] %vm2153, %v1925
      %2173 = vst.msk [vmem:[%s199 + $0x98] sm:$0xff] %vm2153, %v1930
      %2174 = vst.msk [vmem:[%s199 + $0xa0] sm:$0xff] %vm2153, %v1935
      %2175 = vst.msk [vmem:[%s199 + $0xa8] sm:$0xff] %vm2153, %v1940
      %2176 = vst.msk [vmem:[%s199 + $0xb0] sm:$0xff] %vm2153, %v1945
      %2177 = vst.msk [vmem:[%s199 + $0xb8] sm:$0xff] %vm2153, %v1950
      %2178 = vst.msk [vmem:[%s199 + $0xc0] sm:$0xff] %vm2153, %v1955
      %2179 = vst.msk [vmem:[%s199 + $0xc8] sm:$0xff] %vm2153, %v1960
      %2180 = vst.msk [vmem:[%s199 + $0xd0] sm:$0xff] %vm2153, %v1965
      %2181 = vst.msk [vmem:[%s199 + $0xd8] sm:$0xff] %vm2153, %v1970
      %2182 = vst.msk [vmem:[%s199 + $0xe0] sm:$0xff] %vm2153, %v1975
      %2183 = vst.msk [vmem:[%s199 + $0xe8] sm:$0xff] %vm2153, %v1980
      %2184 = vst.msk [vmem:[%s199 + $0xf0] sm:$0xff] %vm2153, %v1985
      %2185 = vst.msk [vmem:[%s199 + $0xf8] sm:$0xff] %vm2153, %v1990
      %2186 = vst.msk [vmem:[%s199 + $0x100] sm:$0xff] %vm2153, %v1995
      %2187 = vst.msk [vmem:[%s199 + $0x108] sm:$0xff] %vm2153, %v2000
      %2188 = vst.msk [vmem:[%s199 + $0x110] sm:$0xff] %vm2153, %v2005
      %2189 = vst.msk [vmem:[%s199 + $0x118] sm:$0xff] %vm2153, %v2010
      %2190 = vst.msk [vmem:[%s199 + $0x120] sm:$0xff] %vm2153, %v2015
      %2191 = vst.msk [vmem:[%s199 + $0x128] sm:$0xff] %vm2153, %v2020
      %2192 = vst.msk [vmem:[%s199 + $0x130] sm:$0xff] %vm2153, %v2025
      %2193 = vst.msk [vmem:[%s199 + $0x138] sm:$0xff] %vm2153, %v2030
      %2194 = vst.msk [vmem:[%s199 + $0x140] sm:$0xff] %vm2153, %v2035
      %2195 = vst.msk [vmem:[%s199 + $0x148] sm:$0xff] %vm2153, %v2040
      %2196 = vst.msk [vmem:[%s199 + $0x150] sm:$0xff] %vm2153, %v2045
      %2197 = vst.msk [vmem:[%s199 + $0x158] sm:$0xff] %vm2153, %v2050
      %2198 = vst.msk [vmem:[%s199 + $0x160] sm:$0xff] %vm2153, %v2055
      %2199 = vst.msk [vmem:[%s199 + $0x168] sm:$0xff] %vm2153, %v2060
      %2200 = vst.msk [vmem:[%s199 + $0x170] sm:$0xff] %vm2153, %v2065
      %2201 = vst.msk [vmem:[%s199 + $0x178] sm:$0xff] %vm2153, %v2070
      %2202 = vst.msk [vmem:[%s199 + $0x180] sm:$0xff] %vm2153, %v2075
      %2203 = vst.msk [vmem:[%s199 + $0x188] sm:$0xff] %vm2153, %v2080
      %2204 = vst.msk [vmem:[%s199 + $0x190] sm:$0xff] %vm2153, %v2085
      %2205 = vst.msk [vmem:[%s199 + $0x198] sm:$0xff] %vm2153, %v2090
      %2206 = vst.msk [vmem:[%s199 + $0x1a0] sm:$0xff] %vm2153, %v2095
      %2207 = vst.msk [vmem:[%s199 + $0x1a8] sm:$0xff] %vm2153, %v2100
      %2208 = vst.msk [vmem:[%s199 + $0x1b0] sm:$0xff] %vm2153, %v2105
      %2209 = vst.msk [vmem:[%s199 + $0x1b8] sm:$0xff] %vm2153, %v2110
      %2210 = vst.msk [vmem:[%s199 + $0x1c0] sm:$0xff] %vm2153, %v2115
      %2211 = vst.msk [vmem:[%s199 + $0x1c8] sm:$0xff] %vm2153, %v2120
      %2212 = vst.msk [vmem:[%s199 + $0x1d0] sm:$0xff] %vm2153, %v2125
      %2213 = vst.msk [vmem:[%s199 + $0x1d8] sm:$0xff] %vm2153, %v2130
      %2214 = vst.msk [vmem:[%s199 + $0x1e0] sm:$0xff] %vm2153, %v2135
      %2215 = vst.msk [vmem:[%s199 + $0x1e8] sm:$0xff] %vm2153, %v2140
      %2216 = vst.msk [vmem:[%s199 + $0x1f0] sm:$0xff] %vm2153, %v2145
      %2217 = vst.msk [vmem:[%s199 + $0x1f8] sm:$0xff] %vm2153, %v2150
      %s2218 = smul.u32 64, %s15
      %p2219 = scmp.lt.s32.totalorder %s2218, 127
      %s2220 = scalar_select %p2219, %s2218, 127
      %s2221 = smul.addr %s2220, 8
      %s2222 = scalar_lea.vmem %s4, %s2221
      // Predicated region
      $region37: #{tpu_custom_call.1} parent=35 // pred_check
        %p2223 = pneg %p122
      $region38: #{tpu_custom_call.1} parent=35 // pred_check_branch
        %2225 = sbr.rel (%p2223) target = $region40
      $region39: #{tpu_custom_call.1} parent=35 // pred_region
        %s2226 = smul.u32 64, %s15
      $region40: #{tpu_custom_call.1} parent=35 // pred_fallthru
        _
    $region36: #{tpu_custom_call.1} parent=5 // pred_fallthru
      _
    %p2227 = scmp.le.s32.totalorder 2, %s10
    // Predicated region
    $region41: #{tpu_custom_call.1} parent=5 // pred_check
      %p2228 = pneg %p2227
    $region42: #{tpu_custom_call.1} parent=5 // pred_check_branch
      %2230 = sbr.rel (%p2228) target = $region44
    $region43: #{tpu_custom_call.1} parent=5 // pred_region
      %s2231 = ssub.s32 %s10, 2
      // Predicated region
      $region45: #{tpu_custom_call.1} parent=43 // pred_check
        %p2232 = pneg %p128
      $region46: #{tpu_custom_call.1} parent=43 // pred_check_branch
        %2234 = sbr.rel (%p2232) target = $region48
      $region47: #{tpu_custom_call.1} parent=43 // pred_region
        %s2235 = smul.u32 64, %s16
        %p2236 = scmp.lt.s32.totalorder %s2235, 127
        %s2237 = scalar_select %p2236, %s2235, 127
        %s2238 = smul.addr %s2237, 8
        %s2239 = scalar_lea.vmem %s4, %s2238
      $region48: #{tpu_custom_call.1} parent=43 // pred_fallthru
        _
    $region44: #{tpu_custom_call.1} parent=5 // pred_fallthru
      _
  $region6: #{tpu_custom_call.1} parent=0 // loop_footer
    %s14 = sadd.s32 1, %s10
  $region7: #{tpu_custom_call.1} parent=0 // loop_footer_branch
    %9 = sbr.rel target = $region3
  $region8: #{tpu_custom_call.1} parent=0 // loop_exit
    _

</llo_original>
